<compile_context>
chip_gen: v6e
topology: v6e:2x2x1
jax: 0.10.0
libtpu: 0.0.40
codegen_flags: <defaults>
</compile_context>

<pallas_src>
import jax
import jax.numpy as jnp
import numpy as np
from jax import lax
from jax.experimental import pallas as pl
from jax.experimental.pallas import tpu as pltpu

ANCHORS = [(10, 13), (16, 30), (33, 23)]   # one YOLO head's anchors
N_CLASS = 3
IMG_SIZE = 416
BN_EPS = 1e-5
LANE = 128


def _round_up(x, m):
    return ((x + m - 1) // m) * m


def _sigmoid(x):
    return 1.0 / (1.0 + jnp.exp(-x))


def _im2col_3x3_t(x_nhwc):
    """(B, H, W, C) -> (9*C, B*H*W) channel-major patches for 3x3/s1/p1 conv."""
    B, H, W, C = x_nhwc.shape
    xp = jnp.pad(x_nhwc, ((0, 0), (1, 1), (1, 1), (0, 0)))
    cols = []
    for di in range(3):
        for dj in range(3):
            cols.append(xp[:, di:di + H, dj:dj + W, :])
    return jnp.concatenate(cols, axis=-1).reshape(B * H * W, 9 * C).T


def _make_kernel(m_real):
    inv_m = 1.0 / float(m_real)

    def kernel(p_ref, w1_ref, b1_ref, gamma_ref, beta_ref, w2_ref, b2_ref,
               a_ref, s_ref, o_ref, mask_ref, out_ref):
        mask = mask_ref[...]                                  # (1, Mp): 1 on real cols
        # --- BasicConv: 3x3 conv as one MXU matmul, channel-major -------------
        h = jnp.dot(w1_ref[...], p_ref[...],
                    preferred_element_type=jnp.float32)       # (C2p, Mp)
        h = h + b1_ref[...]                                   # conv bias
        # BatchNorm2d, training-mode batch statistics (per channel == per row),
        # masked so zero-padded M columns don't contribute to the stats.
        mu = jnp.sum(h * mask, axis=1, keepdims=True) * inv_m
        d = h - mu
        var = jnp.sum(d * d * mask, axis=1, keepdims=True) * inv_m
        scale = gamma_ref[...] * lax.rsqrt(var + BN_EPS)      # (C2p, 1) fold BN scale
        h = jnp.maximum(d * scale + beta_ref[...], 0.0)       # BN + ReLU
        # --- 1x1 conv as MXU matmul -> (n_anchor*(5+nc), Mp) -------------------
        y = jnp.dot(w2_ref[...], h, preferred_element_type=jnp.float32)
        y = y + b2_ref[...]
        # --- fully vectorized YOLO decode: exp(y)*A + sigmoid(y)*S + O ---------
        a_sc = a_ref[...]
        # sigmoid via EUP tanh (keeps the divide off the VPU, exact to f32
        # roundoff).
        sig = 0.5 * jnp.tanh(0.5 * y) + 0.5
        # zero the exp input on non-w/h rows so exp(large logit) * 0 can't -> nan
        e = jnp.exp(jnp.where(a_sc != 0.0, y, 0.0))
        out_ref[...] = e * a_sc + sig * s_ref[...] + o_ref[...]

    return kernel


def yolo_ext_forward(x_nchw, params, anchors=ANCHORS, n_class=N_CLASS,
                     img_size=IMG_SIZE):
    B, C, G, _ = x_nchw.shape
    n_anchor = len(anchors)
    C2 = 2 * C
    GG = G * G
    NP = n_class + 5
    n_out = n_anchor * NP
    M = B * GG
    MP = _round_up(M, LANE)                      # lane-dense M
    K = 9 * C
    KP = _round_up(K, LANE)                      # lane-dense contraction for w1
    C2P = _round_up(C2, LANE)                    # lane-dense hidden channels
    stride = img_size / G

    # ---- glue: PyTorch-layout params -> channel-major matmul operands ----------
    # conv3x3 weight OIHW -> (O, kh*kw*I); columns match im2col (kh, kw, ci) order
    w1_t = jnp.transpose(params["w1"], (0, 2, 3, 1)).reshape(C2, K)
    w1_t = jnp.pad(w1_t, ((0, C2P - C2), (0, KP - K)))                 # (C2p, Kp)
    b1_c = jnp.pad(params["b1"].reshape(C2, 1), ((0, C2P - C2), (0, 0)))
    gamma_c = jnp.pad(params["gamma"].reshape(C2, 1), ((0, C2P - C2), (0, 0)))
    beta_c = jnp.pad(params["beta"].reshape(C2, 1), ((0, C2P - C2), (0, 0)))
    w2_t = jnp.pad(params["w2"].reshape(n_out, C2), ((0, 0), (0, C2P - C2)))
    b2_c = params["b2"].reshape(n_out, 1)

    # ---- decode constants (tiny, built once on host) ----------------------------
    g_idx = np.arange(GG)
    gx = np.tile((g_idx % G).astype(np.float32), B)       # column c = b*GG + g
    gy = np.tile((g_idx // G).astype(np.float32), B)
    A = np.zeros((n_out, MP), np.float32)                 # exp scale (w/h rows)
    S = np.zeros((n_out, MP), np.float32)                 # sigmoid scale
    O = np.zeros((n_out, MP), np.float32)                 # additive grid offset
    for a, (aw, ah) in enumerate(anchors):
        r = a * NP
        S[r + 0, :M] = stride
        S[r + 1, :M] = stride
        O[r + 0, :M] = gx * stride
        O[r + 1, :M] = gy * stride
        A[r + 2, :M] = float(aw)                          # == (aw/stride)*stride
        A[r + 3, :M] = float(ah)
        S[r + 4:r + NP, :M] = 1.0
    col_mask = np.zeros((1, MP), np.float32)
    col_mask[0, :M] = 1.0

    patches_t = _im2col_3x3_t(jnp.transpose(x_nchw, (0, 2, 3, 1)))     # (9C, M)
    patches_t = jnp.pad(patches_t, ((0, KP - K), (0, MP - M)))         # (Kp, Mp)

    cost = pl.CostEstimate(
        flops=2 * C2P * KP * MP + 2 * n_out * C2P * MP,
        transcendentals=3 * n_out * MP + 2 * C2P,
        bytes_accessed=4 * (KP * MP + C2P * KP + 3 * C2P + n_out * C2P
                            + n_out + 4 * n_out * MP + MP),
    )

    kernel = _make_kernel(M)
    out_t = pl.pallas_call(
        kernel,
        out_shape=jax.ShapeDtypeStruct((n_out, MP), jnp.float32),
        grid=(1,),
        in_specs=[
            pl.BlockSpec((KP, MP), lambda i: (0, 0)),
            pl.BlockSpec((C2P, KP), lambda i: (0, 0)),
            pl.BlockSpec((C2P, 1), lambda i: (0, 0)),
            pl.BlockSpec((C2P, 1), lambda i: (0, 0)),
            pl.BlockSpec((C2P, 1), lambda i: (0, 0)),
            pl.BlockSpec((n_out, C2P), lambda i: (0, 0)),
            pl.BlockSpec((n_out, 1), lambda i: (0, 0)),
            pl.BlockSpec((n_out, MP), lambda i: (0, 0)),
            pl.BlockSpec((n_out, MP), lambda i: (0, 0)),
            pl.BlockSpec((n_out, MP), lambda i: (0, 0)),
            pl.BlockSpec((1, MP), lambda i: (0, 0)),
        ],
        out_specs=pl.BlockSpec((n_out, MP), lambda i: (0, 0)),
        compiler_params=pltpu.CompilerParams(dimension_semantics=("arbitrary",)),
        cost_estimate=cost,
    )(patches_t, w1_t, b1_c, gamma_c, beta_c, w2_t, b2_c,
      jnp.asarray(A), jnp.asarray(S), jnp.asarray(O), jnp.asarray(col_mask))

    # cheap layout plumbing back to PyTorch's (B, n_anchor*G*G, 5+n_class)
    out = out_t[:, :M].reshape(n_anchor, NP, B, GG)
    return jnp.transpose(out, (2, 0, 3, 1)).reshape(B, n_anchor * GG, NP)


def reference_forward(x, params, anchors=ANCHORS, n_class=N_CLASS,
                      img_size=IMG_SIZE):
    """Pure-JAX mirror of the PyTorch forward for validation."""
    B, C, G, _ = x.shape
    n_anchor = len(anchors)
    NP = n_class + 5
    y = lax.conv_general_dilated(x, params["w1"], (1, 1), ((1, 1), (1, 1)),
                                 dimension_numbers=("NCHW", "OIHW", "NCHW"))
    y = y + params["b1"][None, :, None, None]
    mu = jnp.mean(y, axis=(0, 2, 3), keepdims=True)
    var = jnp.mean((y - mu) ** 2, axis=(0, 2, 3), keepdims=True)
    y = (y - mu) * lax.rsqrt(var + BN_EPS)
    y = y * params["gamma"][None, :, None, None] + params["beta"][None, :, None, None]
    y = jnp.maximum(y, 0.0)
    w2 = params["w2"].reshape(n_anchor * NP, 2 * C)
    y = jnp.einsum("bchw,oc->bohw", y, w2) + params["b2"][None, :, None, None]

    pred = y.reshape(B, n_anchor, NP, G, G).transpose(0, 1, 3, 4, 2)
    stride = img_size / G
    gx = jnp.arange(G, dtype=jnp.float32)[None, None, None, :]
    gy = jnp.arange(G, dtype=jnp.float32)[None, None, :, None]
    sa = jnp.array(anchors, dtype=jnp.float32) / stride
    aw = sa[:, 0].reshape(1, n_anchor, 1, 1)
    ah = sa[:, 1].reshape(1, n_anchor, 1, 1)
    cx = _sigmoid(pred[..., 0]) + gx
    cy = _sigmoid(pred[..., 1]) + gy
    bw = jnp.exp(pred[..., 2]) * aw
    bh = jnp.exp(pred[..., 3]) * ah
    boxes = jnp.stack([cx, cy, bw, bh], axis=-1) * stride
    obj = _sigmoid(pred[..., 4])
    cls = _sigmoid(pred[..., 5:])
    return jnp.concatenate([boxes.reshape(B, -1, 4),
                            obj.reshape(B, -1, 1),
                            cls.reshape(B, -1, n_class)], axis=-1)


if __name__ == "__main__":
    key = jax.random.PRNGKey(0)
    B, C, G = 2, 4, 16
    C2 = 2 * C
    n_out = len(ANCHORS) * (N_CLASS + 5)         # 24
    ks = jax.random.split(key, 7)
    params = {
        "w1": jax.random.normal(ks[0], (C2, C, 3, 3), jnp.float32) * 0.1,   # OIHW
        "b1": jax.random.normal(ks[1], (C2,), jnp.float32) * 0.1,
        "gamma": 1.0 + 0.1 * jax.random.normal(ks[2], (C2,), jnp.float32),
        "beta": 0.1 * jax.random.normal(ks[3], (C2,), jnp.float32),
        "w2": jax.random.normal(ks[4], (n_out, C2, 1, 1), jnp.float32) * 0.1,
        "b2": jax.random.normal(ks[5], (n_out,), jnp.float32) * 0.1,
    }
    x = jax.random.normal(ks[6], (B, C, G, G), jnp.float32)

    out = jax.block_until_ready(yolo_ext_forward(x, params))
    ref = jax.block_until_ready(reference_forward(x, params))
    assert out.shape == (B, len(ANCHORS) * G * G, N_CLASS + 5)
    np.testing.assert_allclose(np.asarray(out), np.asarray(ref), rtol=2e-3, atol=2e-3)
    print("KERNEL_OK")
</pallas_src>

<mosaic_0001>
module attributes {stable_mosaic.version = 11 : i64} {
  func.func @kernel(%arg0: i32, %arg1: memref<128x512xf32, #tpu.memory_space<vmem>>, %arg2: memref<128x128xf32, #tpu.memory_space<vmem>>, %arg3: memref<128x1xf32, #tpu.memory_space<vmem>>, %arg4: memref<128x1xf32, #tpu.memory_space<vmem>>, %arg5: memref<128x1xf32, #tpu.memory_space<vmem>>, %arg6: memref<24x128xf32, #tpu.memory_space<vmem>>, %arg7: memref<24x1xf32, #tpu.memory_space<vmem>>, %arg8: memref<24x512xf32, #tpu.memory_space<vmem>>, %arg9: memref<24x512xf32, #tpu.memory_space<vmem>>, %arg10: memref<24x512xf32, #tpu.memory_space<vmem>>, %arg11: memref<1x512xf32, #tpu.memory_space<vmem>>, %arg12: memref<24x512xf32, #tpu.memory_space<vmem>>) attributes {dimension_semantics = [#tpu.dimension_semantics<arbitrary>], iteration_bounds = array<i64: 1>, scalar_prefetch = 0 : i64, scratch_operands = 0 : i64, tpu.core_type = #tpu.core_type<tc>, window_params = [{pipeline_mode = #tpu.pipeline_mode<synchronous>, transform_indices = @transform_0, window_bounds = array<i64: 128, 512>}, {pipeline_mode = #tpu.pipeline_mode<synchronous>, transform_indices = @transform_1, window_bounds = array<i64: 128, 128>}, {pipeline_mode = #tpu.pipeline_mode<synchronous>, transform_indices = @transform_2, window_bounds = array<i64: 128, 1>}, {pipeline_mode = #tpu.pipeline_mode<synchronous>, transform_indices = @transform_3, window_bounds = array<i64: 128, 1>}, {pipeline_mode = #tpu.pipeline_mode<synchronous>, transform_indices = @transform_4, window_bounds = array<i64: 128, 1>}, {pipeline_mode = #tpu.pipeline_mode<synchronous>, transform_indices = @transform_5, window_bounds = array<i64: 24, 128>}, {pipeline_mode = #tpu.pipeline_mode<synchronous>, transform_indices = @transform_6, window_bounds = array<i64: 24, 1>}, {pipeline_mode = #tpu.pipeline_mode<synchronous>, transform_indices = @transform_7, window_bounds = array<i64: 24, 512>}, {pipeline_mode = #tpu.pipeline_mode<synchronous>, transform_indices = @transform_8, window_bounds = array<i64: 24, 512>}, {pipeline_mode = #tpu.pipeline_mode<synchronous>, transform_indices = @transform_9, window_bounds = array<i64: 24, 512>}, {pipeline_mode = #tpu.pipeline_mode<synchronous>, transform_indices = @transform_10, window_bounds = array<i64: 1, 512>}, {pipeline_mode = #tpu.pipeline_mode<synchronous>, transform_indices = @transform_11, window_bounds = array<i64: 24, 512>}]} {
    %c0 = arith.constant 0 : index
    %c0_0 = arith.constant 0 : index
    %0 = vector.load %arg11[%c0, %c0_0] : memref<1x512xf32, #tpu.memory_space<vmem>>, vector<1x512xf32>
    %c0_1 = arith.constant 0 : index
    %c0_2 = arith.constant 0 : index
    %1 = vector.load %arg2[%c0_1, %c0_2] : memref<128x128xf32, #tpu.memory_space<vmem>>, vector<128x128xf32>
    %c0_3 = arith.constant 0 : index
    %c0_4 = arith.constant 0 : index
    %2 = vector.load %arg1[%c0_3, %c0_4] : memref<128x512xf32, #tpu.memory_space<vmem>>, vector<128x512xf32>
    %cst = arith.constant dense<0.000000e+00> : vector<128x512xf32>
    %3 = tpu.matmul %1, %2, %cst {dimension_numbers = #tpu.dot_dimension_numbers<[1], [0], [0], [1], [0, 0, 1, 1], [], []>} : vector<128x128xf32>, vector<128x512xf32>, vector<128x512xf32> -> vector<128x512xf32>
    %c0_5 = arith.constant 0 : index
    %c0_6 = arith.constant 0 : index
    %4 = vector.load %arg3[%c0_5, %c0_6] : memref<128x1xf32, #tpu.memory_space<vmem>>, vector<128x1xf32>
    %5 = vector.broadcast %4 : vector<128x1xf32> to vector<128x512xf32>
    %6 = arith.addf %3, %5 : vector<128x512xf32>
    %7 = vector.broadcast %0 : vector<1x512xf32> to vector<128x512xf32>
    %8 = arith.mulf %6, %7 : vector<128x512xf32>
    %cst_7 = arith.constant dense<0.000000e+00> : vector<128xf32>
    %9 = vector.multi_reduction <add>, %8, %cst_7 [1] : vector<128x512xf32> to vector<128xf32>
    %10 = vector.shape_cast %9 : vector<128xf32> to vector<128x1xf32>
    %cst_8 = arith.constant 0.001953125 : f32
    %11 = vector.broadcast %cst_8 : f32 to vector<128x1xf32>
    %12 = arith.mulf %10, %11 : vector<128x1xf32>
    %13 = vector.broadcast %12 : vector<128x1xf32> to vector<128x512xf32>
    %14 = arith.subf %6, %13 : vector<128x512xf32>
    %15 = arith.mulf %14, %14 : vector<128x512xf32>
    %16 = vector.broadcast %0 : vector<1x512xf32> to vector<128x512xf32>
    %17 = arith.mulf %15, %16 : vector<128x512xf32>
    %cst_9 = arith.constant dense<0.000000e+00> : vector<128xf32>
    %18 = vector.multi_reduction <add>, %17, %cst_9 [1] : vector<128x512xf32> to vector<128xf32>
    %19 = vector.shape_cast %18 : vector<128xf32> to vector<128x1xf32>
    %cst_10 = arith.constant 0.001953125 : f32
    %20 = vector.broadcast %cst_10 : f32 to vector<128x1xf32>
    %21 = arith.mulf %19, %20 : vector<128x1xf32>
    %c0_11 = arith.constant 0 : index
    %c0_12 = arith.constant 0 : index
    %22 = vector.load %arg4[%c0_11, %c0_12] : memref<128x1xf32, #tpu.memory_space<vmem>>, vector<128x1xf32>
    %cst_13 = arith.constant 9.99999974E-6 : f32
    %23 = vector.broadcast %cst_13 : f32 to vector<128x1xf32>
    %24 = arith.addf %21, %23 : vector<128x1xf32>
    %25 = math.rsqrt %24 : vector<128x1xf32>
    %26 = arith.mulf %22, %25 : vector<128x1xf32>
    %27 = vector.broadcast %26 : vector<128x1xf32> to vector<128x512xf32>
    %28 = arith.mulf %14, %27 : vector<128x512xf32>
    %c0_14 = arith.constant 0 : index
    %c0_15 = arith.constant 0 : index
    %29 = vector.load %arg5[%c0_14, %c0_15] : memref<128x1xf32, #tpu.memory_space<vmem>>, vector<128x1xf32>
    %30 = vector.broadcast %29 : vector<128x1xf32> to vector<128x512xf32>
    %31 = arith.addf %28, %30 : vector<128x512xf32>
    %cst_16 = arith.constant 0.000000e+00 : f32
    %32 = vector.broadcast %cst_16 : f32 to vector<128x512xf32>
    %33 = arith.maximumf %31, %32 : vector<128x512xf32>
    %c0_17 = arith.constant 0 : index
    %c0_18 = arith.constant 0 : index
    %34 = vector.load %arg6[%c0_17, %c0_18] : memref<24x128xf32, #tpu.memory_space<vmem>>, vector<24x128xf32>
    %cst_19 = arith.constant dense<0.000000e+00> : vector<24x512xf32>
    %35 = tpu.matmul %34, %33, %cst_19 {dimension_numbers = #tpu.dot_dimension_numbers<[1], [0], [0], [1], [0, 0, 1, 1], [], []>} : vector<24x128xf32>, vector<128x512xf32>, vector<24x512xf32> -> vector<24x512xf32>
    %c0_20 = arith.constant 0 : index
    %c0_21 = arith.constant 0 : index
    %36 = vector.load %arg7[%c0_20, %c0_21] : memref<24x1xf32, #tpu.memory_space<vmem>>, vector<24x1xf32>
    %37 = vector.broadcast %36 : vector<24x1xf32> to vector<24x512xf32>
    %38 = arith.addf %35, %37 : vector<24x512xf32>
    %c0_22 = arith.constant 0 : index
    %c0_23 = arith.constant 0 : index
    %39 = vector.load %arg8[%c0_22, %c0_23] : memref<24x512xf32, #tpu.memory_space<vmem>>, vector<24x512xf32>
    %cst_24 = arith.constant 5.000000e-01 : f32
    %40 = vector.broadcast %cst_24 : f32 to vector<24x512xf32>
    %41 = arith.mulf %40, %38 : vector<24x512xf32>
    %42 = math.tanh %41 : vector<24x512xf32>
    %cst_25 = arith.constant 5.000000e-01 : f32
    %43 = vector.broadcast %cst_25 : f32 to vector<24x512xf32>
    %44 = arith.mulf %43, %42 : vector<24x512xf32>
    %cst_26 = arith.constant 5.000000e-01 : f32
    %45 = vector.broadcast %cst_26 : f32 to vector<24x512xf32>
    %46 = arith.addf %44, %45 : vector<24x512xf32>
    %cst_27 = arith.constant 0.000000e+00 : f32
    %47 = vector.broadcast %cst_27 : f32 to vector<24x512xf32>
    %48 = arith.cmpf one, %39, %47 : vector<24x512xf32>
    %cst_28 = arith.constant 0.000000e+00 : f32
    %49 = vector.broadcast %cst_28 : f32 to vector<24x512xf32>
    %50 = arith.select %48, %38, %49 : vector<24x512xi1>, vector<24x512xf32>
    %51 = math.exp %50 : vector<24x512xf32>
    %52 = arith.mulf %51, %39 : vector<24x512xf32>
    %c0_29 = arith.constant 0 : index
    %c0_30 = arith.constant 0 : index
    %53 = vector.load %arg9[%c0_29, %c0_30] : memref<24x512xf32, #tpu.memory_space<vmem>>, vector<24x512xf32>
    %54 = arith.mulf %46, %53 : vector<24x512xf32>
    %55 = arith.addf %52, %54 : vector<24x512xf32>
    %c0_31 = arith.constant 0 : index
    %c0_32 = arith.constant 0 : index
    %56 = vector.load %arg10[%c0_31, %c0_32] : memref<24x512xf32, #tpu.memory_space<vmem>>, vector<24x512xf32>
    %57 = arith.addf %55, %56 : vector<24x512xf32>
    %c0_33 = arith.constant 0 : index
    %c0_34 = arith.constant 0 : index
    %58 = vector.load %arg12[%c0_33, %c0_34] : memref<24x512xf32, #tpu.memory_space<vmem>>, vector<24x512xf32>
    tpu.vector_store %arg12[%c0_33, %c0_34], %57 {strides = array<i32>} : memref<24x512xf32, #tpu.memory_space<vmem>>, vector<24x512xf32>,
    return
  }
  func.func @transform_0(%arg0: i32) -> (i32, i32) {
    %c0_i32 = arith.constant 0 : i32
    %c0_i32_0 = arith.constant 0 : i32
    %c0_i32_1 = arith.constant 0 : i32
    return %c0_i32, %c0_i32_0 : i32, i32
  }
  func.func @transform_1(%arg0: i32) -> (i32, i32) {
    %c0_i32 = arith.constant 0 : i32
    %c0_i32_0 = arith.constant 0 : i32
    %c0_i32_1 = arith.constant 0 : i32
    return %c0_i32, %c0_i32_0 : i32, i32
  }
  func.func @transform_2(%arg0: i32) -> (i32, i32) {
    %c0_i32 = arith.constant 0 : i32
    %c0_i32_0 = arith.constant 0 : i32
    %c0_i32_1 = arith.constant 0 : i32
    return %c0_i32, %c0_i32_0 : i32, i32
  }
  func.func @transform_3(%arg0: i32) -> (i32, i32) {
    %c0_i32 = arith.constant 0 : i32
    %c0_i32_0 = arith.constant 0 : i32
    %c0_i32_1 = arith.constant 0 : i32
    return %c0_i32, %c0_i32_0 : i32, i32
  }
  func.func @transform_4(%arg0: i32) -> (i32, i32) {
    %c0_i32 = arith.constant 0 : i32
    %c0_i32_0 = arith.constant 0 : i32
    %c0_i32_1 = arith.constant 0 : i32
    return %c0_i32, %c0_i32_0 : i32, i32
  }
  func.func @transform_5(%arg0: i32) -> (i32, i32) {
    %c0_i32 = arith.constant 0 : i32
    %c0_i32_0 = arith.constant 0 : i32
    %c0_i32_1 = arith.constant 0 : i32
    return %c0_i32, %c0_i32_0 : i32, i32
  }
  func.func @transform_6(%arg0: i32) -> (i32, i32) {
    %c0_i32 = arith.constant 0 : i32
    %c0_i32_0 = arith.constant 0 : i32
    %c0_i32_1 = arith.constant 0 : i32
    return %c0_i32, %c0_i32_0 : i32, i32
  }
  func.func @transform_7(%arg0: i32) -> (i32, i32) {
    %c0_i32 = arith.constant 0 : i32
    %c0_i32_0 = arith.constant 0 : i32
    %c0_i32_1 = arith.constant 0 : i32
    return %c0_i32, %c0_i32_0 : i32, i32
  }
  func.func @transform_8(%arg0: i32) -> (i32, i32) {
    %c0_i32 = arith.constant 0 : i32
    %c0_i32_0 = arith.constant 0 : i32
    %c0_i32_1 = arith.constant 0 : i32
    return %c0_i32, %c0_i32_0 : i32, i32
  }
  func.func @transform_9(%arg0: i32) -> (i32, i32) {
    %c0_i32 = arith.constant 0 : i32
    %c0_i32_0 = arith.constant 0 : i32
    %c0_i32_1 = arith.constant 0 : i32
    return %c0_i32, %c0_i32_0 : i32, i32
  }
  func.func @transform_10(%arg0: i32) -> (i32, i32) {
    %c0_i32 = arith.constant 0 : i32
    %c0_i32_0 = arith.constant 0 : i32
    %c0_i32_1 = arith.constant 0 : i32
    return %c0_i32, %c0_i32_0 : i32, i32
  }
  func.func @transform_11(%arg0: i32) -> (i32, i32) {
    %c0_i32 = arith.constant 0 : i32
    %c0_i32_0 = arith.constant 0 : i32
    %c0_i32_1 = arith.constant 0 : i32
    return %c0_i32, %c0_i32_0 : i32, i32
  }
}

</mosaic_0001>

<llo_original>
// kernel: tpu_custom_call.1
$region0: #{tpu_custom_call.1}
  #allocation0 [shape = 'u32[]', space=smem, size = 0x4, offset = 0x4, fixed_abs, tag = 'smem constant byte address 0x4 - core index']
  #allocation1 [shape = 'u32[144,128]{1,0:T(1,128)}', space=vmem, size = 0x12000, scoped, tag = 'internal scratch']
  %s0 = inlined_call_operand.hbm [shape: f32[128,512], index: 0, kind: input, shape index: {}]
  %s1 = inlined_call_operand.vmem [shape: f32[128,128], index: 1, kind: input, shape index: {}]
  %s2 = inlined_call_operand.vmem [shape: f32[128,1], index: 2, kind: input, shape index: {}]
  %s3 = inlined_call_operand.vmem [shape: f32[128,1], index: 3, kind: input, shape index: {}]
  %s4 = inlined_call_operand.vmem [shape: f32[128,1], index: 4, kind: input, shape index: {}]
  %s5 = inlined_call_operand.hbm [shape: f32[24,128], index: 5, kind: input, shape index: {}]
  %s6 = inlined_call_operand.vmem [shape: f32[24,1], index: 6, kind: input, shape index: {}]
  %s7 = inlined_call_operand.vmem [shape: f32[24,512], index: 7, kind: input, shape index: {}]
  %s8 = inlined_call_operand.vmem [shape: f32[24,512], index: 8, kind: input, shape index: {}]
  %s9 = inlined_call_operand.vmem [shape: f32[24,512], index: 9, kind: input, shape index: {}]
  %s10 = inlined_call_operand.vmem [shape: f32[1,512], index: 10, kind: input, shape index: {}]
  %s11 = inlined_call_operand.hbm [shape: f32[24,512], index: 11, kind: output, shape index: {}]
  %s12 = sld [smem:[#allocation0]]
  $region62: #{tpu_custom_call.1} parent=0
    _
  %s14 = ssub.s32 1, %s12
  %s15 = scalar_select 0, %s14, %s12
  $region1: #{tpu_custom_call.1} parent=0
    #allocation2 [shape = 'u8[262144]{0}', space=vmem, size = 0x40000, scoped, tag = 'input window, operand 0, single buffered']
    #allocation3 [shape = 's32[1]{0}', space=sflag, size = 0x4, scoped, tag = 'scoped memory for tpu_custom_call.1']
    #allocation4 [shape = 's32[1]{0}', space=sflag, size = 0x4, scoped, tag = 'scoped memory for tpu_custom_call.1']
    #allocation5 [shape = 'u8[12288]{0}', space=vmem, size = 0x3000, scoped, tag = 'input window, operand 5, single buffered']
    #allocation6 [shape = 's32[1]{0}', space=sflag, size = 0x4, scoped, tag = 'scoped memory for tpu_custom_call.1']
    #allocation7 [shape = 'u8[49152]{0}', space=vmem, size = 0xc000, scoped, tag = 'output window, operand 0, single buffered']
    %16 = vsyncpa [#allocation3], 0
    %17 = vsyncpa [#allocation6], 0
    %18 = vsyncpa [#allocation4], 0
    // Predicated region
    $region2: #{tpu_custom_call.1} parent=1 // pred_check
      _
    $region3: #{tpu_custom_call.1} parent=1 // pred_check_branch
      %20 = sbr.rel (0) target = $region5
    $region4: #{tpu_custom_call.1} parent=1 // pred_region
      %s22 = ssub.s32 8192, 8192
      %23 = vsyncadd [#allocation3], %s22
      %s24 = sshll.u32 [#allocation2], 4
      %s25 = int_to_ptr.vmem [resolvable:$true] %s24
      %30 = dma.hbm_to_vmem [thread:$0]  %s0, 8192, %s25, [#allocation3], 512, 512, 32
    $region5: #{tpu_custom_call.1} parent=1 // pred_fallthru
      _
    // Predicated region
    $region6: #{tpu_custom_call.1} parent=1 // pred_check
      _
    $region7: #{tpu_custom_call.1} parent=1 // pred_check_branch
      %32 = sbr.rel (0) target = $region9
    $region8: #{tpu_custom_call.1} parent=1 // pred_region
      _
    $region9: #{tpu_custom_call.1} parent=1 // pred_fallthru
      _
    // Predicated region
    $region10: #{tpu_custom_call.1} parent=1 // pred_check
      _
    $region11: #{tpu_custom_call.1} parent=1 // pred_check_branch
      %34 = sbr.rel (0) target = $region13
    $region12: #{tpu_custom_call.1} parent=1 // pred_region
      _
    $region13: #{tpu_custom_call.1} parent=1 // pred_fallthru
      _
    // Predicated region
    $region14: #{tpu_custom_call.1} parent=1 // pred_check
      _
    $region15: #{tpu_custom_call.1} parent=1 // pred_check_branch
      %36 = sbr.rel (0) target = $region17
    $region16: #{tpu_custom_call.1} parent=1 // pred_region
      _
    $region17: #{tpu_custom_call.1} parent=1 // pred_fallthru
      _
    // Predicated region
    $region18: #{tpu_custom_call.1} parent=1 // pred_check
      _
    $region19: #{tpu_custom_call.1} parent=1 // pred_check_branch
      %38 = sbr.rel (0) target = $region21
    $region20: #{tpu_custom_call.1} parent=1 // pred_region
      _
    $region21: #{tpu_custom_call.1} parent=1 // pred_fallthru
      _
    // Predicated region
    $region22: #{tpu_custom_call.1} parent=1 // pred_check
      _
    $region23: #{tpu_custom_call.1} parent=1 // pred_check_branch
      %40 = sbr.rel (0) target = $region25
    $region24: #{tpu_custom_call.1} parent=1 // pred_region
      %s42 = ssub.s32 384, 384
      %43 = vsyncadd [#allocation6], %s42
      %s44 = sshll.u32 [#allocation5], 4
      %s45 = int_to_ptr.vmem [resolvable:$true] %s44
      %50 = dma.hbm_to_vmem [thread:$0]  %s5, 384, %s45, [#allocation6], 128, 128, 8
    $region25: #{tpu_custom_call.1} parent=1 // pred_fallthru
      _
    // Predicated region
    $region26: #{tpu_custom_call.1} parent=1 // pred_check
      _
    $region27: #{tpu_custom_call.1} parent=1 // pred_check_branch
      %52 = sbr.rel (0) target = $region29
    $region28: #{tpu_custom_call.1} parent=1 // pred_region
      _
    $region29: #{tpu_custom_call.1} parent=1 // pred_fallthru
      _
    // Predicated region
    $region30: #{tpu_custom_call.1} parent=1 // pred_check
      _
    $region31: #{tpu_custom_call.1} parent=1 // pred_check_branch
      %54 = sbr.rel (0) target = $region33
    $region32: #{tpu_custom_call.1} parent=1 // pred_region
      _
    $region33: #{tpu_custom_call.1} parent=1 // pred_fallthru
      _
    // Predicated region
    $region34: #{tpu_custom_call.1} parent=1 // pred_check
      _
    $region35: #{tpu_custom_call.1} parent=1 // pred_check_branch
      %56 = sbr.rel (0) target = $region37
    $region36: #{tpu_custom_call.1} parent=1 // pred_region
      _
    $region37: #{tpu_custom_call.1} parent=1 // pred_fallthru
      _
    // Predicated region
    $region38: #{tpu_custom_call.1} parent=1 // pred_check
      _
    $region39: #{tpu_custom_call.1} parent=1 // pred_check_branch
      %58 = sbr.rel (0) target = $region41
    $region40: #{tpu_custom_call.1} parent=1 // pred_region
      _
    $region41: #{tpu_custom_call.1} parent=1 // pred_fallthru
      _
    // Predicated region
    $region42: #{tpu_custom_call.1} parent=1 // pred_check
      _
    $region43: #{tpu_custom_call.1} parent=1 // pred_check_branch
      %60 = sbr.rel (0) target = $region45
    $region44: #{tpu_custom_call.1} parent=1 // pred_region
      _
    $region45: #{tpu_custom_call.1} parent=1 // pred_fallthru
      _
    // Predicated region
    $region46: #{tpu_custom_call.1} parent=1 // pred_check
      _
    $region47: #{tpu_custom_call.1} parent=1 // pred_check_branch
      %62 = sbr.rel (0) target = $region49
    $region48: #{tpu_custom_call.1} parent=1 // pred_region
      %63 = dma.done [#allocation3], 8192
    $region49: #{tpu_custom_call.1} parent=1 // pred_fallthru
      _
    // Predicated region
    $region50: #{tpu_custom_call.1} parent=1 // pred_check
      _
    $region51: #{tpu_custom_call.1} parent=1 // pred_check_branch
      %65 = sbr.rel (0) target = $region53
    $region52: #{tpu_custom_call.1} parent=1 // pred_region
      %66 = dma.done [#allocation6], 384
    $region53: #{tpu_custom_call.1} parent=1 // pred_fallthru
      _
    %v67 = vld [vmem:[%s10] sm:$0xf]
    %v68 = vld [vmem:[%s1] sm:$0xff]
    %v69 = vld [vmem:[%s1 + $0x8] sm:$0xff]
    %v70 = vld [vmem:[%s1 + $0x10] sm:$0xff]
    %v71 = vld [vmem:[%s1 + $0x18] sm:$0xff]
    %v72 = vld [vmem:[%s1 + $0x20] sm:$0xff]
    %v73 = vld [vmem:[%s1 + $0x28] sm:$0xff]
    %v74 = vld [vmem:[%s1 + $0x30] sm:$0xff]
    %v75 = vld [vmem:[%s1 + $0x38] sm:$0xff]
    %v76 = vld [vmem:[%s1 + $0x40] sm:$0xff]
    %v77 = vld [vmem:[%s1 + $0x48] sm:$0xff]
    %v78 = vld [vmem:[%s1 + $0x50] sm:$0xff]
    %v79 = vld [vmem:[%s1 + $0x58] sm:$0xff]
    %v80 = vld [vmem:[%s1 + $0x60] sm:$0xff]
    %v81 = vld [vmem:[%s1 + $0x68] sm:$0xff]
    %v82 = vld [vmem:[%s1 + $0x70] sm:$0xff]
    %v83 = vld [vmem:[%s1 + $0x78] sm:$0xff]
    %v84 = vld [vmem:[#allocation2] sm:$0xff]
    %v85 = vld [vmem:[#allocation2 + $0x8] sm:$0xff]
    %v86 = vld [vmem:[#allocation2 + $0x10] sm:$0xff]
    %v87 = vld [vmem:[#allocation2 + $0x18] sm:$0xff]
    %v88 = vld [vmem:[#allocation2 + $0x20] sm:$0xff]
    %v89 = vld [vmem:[#allocation2 + $0x28] sm:$0xff]
    %v90 = vld [vmem:[#allocation2 + $0x30] sm:$0xff]
    %v91 = vld [vmem:[#allocation2 + $0x38] sm:$0xff]
    %v92 = vld [vmem:[#allocation2 + $0x40] sm:$0xff]
    %v93 = vld [vmem:[#allocation2 + $0x48] sm:$0xff]
    %v94 = vld [vmem:[#allocation2 + $0x50] sm:$0xff]
    %v95 = vld [vmem:[#allocation2 + $0x58] sm:$0xff]
    %v96 = vld [vmem:[#allocation2 + $0x60] sm:$0xff]
    %v97 = vld [vmem:[#allocation2 + $0x68] sm:$0xff]
    %v98 = vld [vmem:[#allocation2 + $0x70] sm:$0xff]
    %v99 = vld [vmem:[#allocation2 + $0x78] sm:$0xff]
    %v100 = vld [vmem:[#allocation2 + $0x80] sm:$0xff]
    %v101 = vld [vmem:[#allocation2 + $0x88] sm:$0xff]
    %v102 = vld [vmem:[#allocation2 + $0x90] sm:$0xff]
    %v103 = vld [vmem:[#allocation2 + $0x98] sm:$0xff]
    %v104 = vld [vmem:[#allocation2 + $0xa0] sm:$0xff]
    %v105 = vld [vmem:[#allocation2 + $0xa8] sm:$0xff]
    %v106 = vld [vmem:[#allocation2 + $0xb0] sm:$0xff]
    %v107 = vld [vmem:[#allocation2 + $0xb8] sm:$0xff]
    %v108 = vld [vmem:[#allocation2 + $0xc0] sm:$0xff]
    %v109 = vld [vmem:[#allocation2 + $0xc8] sm:$0xff]
    %v110 = vld [vmem:[#allocation2 + $0xd0] sm:$0xff]
    %v111 = vld [vmem:[#allocation2 + $0xd8] sm:$0xff]
    %v112 = vld [vmem:[#allocation2 + $0xe0] sm:$0xff]
    %v113 = vld [vmem:[#allocation2 + $0xe8] sm:$0xff]
    %v114 = vld [vmem:[#allocation2 + $0xf0] sm:$0xff]
    %v115 = vld [vmem:[#allocation2 + $0xf8] sm:$0xff]
    %v116 = vld [vmem:[#allocation2 + $0x100] sm:$0xff]
    %v117 = vld [vmem:[#allocation2 + $0x108] sm:$0xff]
    %v118 = vld [vmem:[#allocation2 + $0x110] sm:$0xff]
    %v119 = vld [vmem:[#allocation2 + $0x118] sm:$0xff]
    %v120 = vld [vmem:[#allocation2 + $0x120] sm:$0xff]
    %v121 = vld [vmem:[#allocation2 + $0x128] sm:$0xff]
    %v122 = vld [vmem:[#allocation2 + $0x130] sm:$0xff]
    %v123 = vld [vmem:[#allocation2 + $0x138] sm:$0xff]
    %v124 = vld [vmem:[#allocation2 + $0x140] sm:$0xff]
    %v125 = vld [vmem:[#allocation2 + $0x148] sm:$0xff]
    %v126 = vld [vmem:[#allocation2 + $0x150] sm:$0xff]
    %v127 = vld [vmem:[#allocation2 + $0x158] sm:$0xff]
    %v128 = vld [vmem:[#allocation2 + $0x160] sm:$0xff]
    %v129 = vld [vmem:[#allocation2 + $0x168] sm:$0xff]
    %v130 = vld [vmem:[#allocation2 + $0x170] sm:$0xff]
    %v131 = vld [vmem:[#allocation2 + $0x178] sm:$0xff]
    %v132 = vld [vmem:[#allocation2 + $0x180] sm:$0xff]
    %v133 = vld [vmem:[#allocation2 + $0x188] sm:$0xff]
    %v134 = vld [vmem:[#allocation2 + $0x190] sm:$0xff]
    %v135 = vld [vmem:[#allocation2 + $0x198] sm:$0xff]
    %v136 = vld [vmem:[#allocation2 + $0x1a0] sm:$0xff]
    %v137 = vld [vmem:[#allocation2 + $0x1a8] sm:$0xff]
    %v138 = vld [vmem:[#allocation2 + $0x1b0] sm:$0xff]
    %v139 = vld [vmem:[#allocation2 + $0x1b8] sm:$0xff]
    %v140 = vld [vmem:[#allocation2 + $0x1c0] sm:$0xff]
    %v141 = vld [vmem:[#allocation2 + $0x1c8] sm:$0xff]
    %v142 = vld [vmem:[#allocation2 + $0x1d0] sm:$0xff]
    %v143 = vld [vmem:[#allocation2 + $0x1d8] sm:$0xff]
    %v144 = vld [vmem:[#allocation2 + $0x1e0] sm:$0xff]
    %v145 = vld [vmem:[#allocation2 + $0x1e8] sm:$0xff]
    %v146 = vld [vmem:[#allocation2 + $0x1f0] sm:$0xff]
    %v147 = vld [vmem:[#allocation2 + $0x1f8] sm:$0xff]
    %v148 = vld [vmem:[%s2] sm:$0xff]
    %v149 = vld [vmem:[%s2 + $0x8] sm:$0xff]
    %v150 = vld [vmem:[%s2 + $0x10] sm:$0xff]
    %v151 = vld [vmem:[%s2 + $0x18] sm:$0xff]
    %v152 = vld [vmem:[%s2 + $0x20] sm:$0xff]
    %v153 = vld [vmem:[%s2 + $0x28] sm:$0xff]
    %v154 = vld [vmem:[%s2 + $0x30] sm:$0xff]
    %v155 = vld [vmem:[%s2 + $0x38] sm:$0xff]
    %v156 = vld [vmem:[%s2 + $0x40] sm:$0xff]
    %v157 = vld [vmem:[%s2 + $0x48] sm:$0xff]
    %v158 = vld [vmem:[%s2 + $0x50] sm:$0xff]
    %v159 = vld [vmem:[%s2 + $0x58] sm:$0xff]
    %v160 = vld [vmem:[%s2 + $0x60] sm:$0xff]
    %v161 = vld [vmem:[%s2 + $0x68] sm:$0xff]
    %v162 = vld [vmem:[%s2 + $0x70] sm:$0xff]
    %v163 = vld [vmem:[%s2 + $0x78] sm:$0xff]
    %165 = vset.pattern.permute.xlu0 0
    %166 = vperm.xlu0 %165, %v148
    %v167 = vpop.permute.xlu0 %166
    %170 = vset.pattern.permute.xlu0 0
    %171 = vperm.xlu0 %170, %v149
    %v172 = vpop.permute.xlu0 %171
    %175 = vset.pattern.permute.xlu0 0
    %176 = vperm.xlu0 %175, %v150
    %v177 = vpop.permute.xlu0 %176
    %180 = vset.pattern.permute.xlu0 0
    %181 = vperm.xlu0 %180, %v151
    %v182 = vpop.permute.xlu0 %181
    %185 = vset.pattern.permute.xlu0 0
    %186 = vperm.xlu0 %185, %v152
    %v187 = vpop.permute.xlu0 %186
    %190 = vset.pattern.permute.xlu0 0
    %191 = vperm.xlu0 %190, %v153
    %v192 = vpop.permute.xlu0 %191
    %195 = vset.pattern.permute.xlu0 0
    %196 = vperm.xlu0 %195, %v154
    %v197 = vpop.permute.xlu0 %196
    %200 = vset.pattern.permute.xlu0 0
    %201 = vperm.xlu0 %200, %v155
    %v202 = vpop.permute.xlu0 %201
    %205 = vset.pattern.permute.xlu0 0
    %206 = vperm.xlu0 %205, %v156
    %v207 = vpop.permute.xlu0 %206
    %210 = vset.pattern.permute.xlu0 0
    %211 = vperm.xlu0 %210, %v157
    %v212 = vpop.permute.xlu0 %211
    %215 = vset.pattern.permute.xlu0 0
    %216 = vperm.xlu0 %215, %v158
    %v217 = vpop.permute.xlu0 %216
    %220 = vset.pattern.permute.xlu0 0
    %221 = vperm.xlu0 %220, %v159
    %v222 = vpop.permute.xlu0 %221
    %225 = vset.pattern.permute.xlu0 0
    %226 = vperm.xlu0 %225, %v160
    %v227 = vpop.permute.xlu0 %226
    %230 = vset.pattern.permute.xlu0 0
    %231 = vperm.xlu0 %230, %v161
    %v232 = vpop.permute.xlu0 %231
    %235 = vset.pattern.permute.xlu0 0
    %236 = vperm.xlu0 %235, %v162
    %v237 = vpop.permute.xlu0 %236
    %240 = vset.pattern.permute.xlu0 0
    %241 = vperm.xlu0 %240, %v163
    %v242 = vpop.permute.xlu0 %241
    %244 = vmatprep.subr.mxu0 %v145
    %245 = vmatpush1.msra.mxu0 %v144
    %246 = vmatprep.subr.mxu0 %v141
    %247 = vmatpush1.msra.mxu0 %v140
    %248 = vmatprep.subr.mxu0 %v137
    %249 = vmatpush1.msra.mxu0 %v136
    %250 = vmatprep.subr.mxu0 %v133
    %251 = vmatpush1.msra.mxu0 %v132
    %252 = vmatprep.subr.mxu0 %v129
    %253 = vmatpush1.msra.mxu0 %v128
    %254 = vmatprep.subr.mxu0 %v125
    %255 = vmatpush1.msra.mxu0 %v124
    %256 = vmatprep.subr.mxu0 %v121
    %257 = vmatpush1.msra.mxu0 %v120
    %258 = vmatprep.subr.mxu0 %v117
    %259 = vmatpush1.msra.mxu0 %v116
    %260 = vmatprep.subr.mxu0 %v113
    %261 = vmatpush1.msra.mxu0 %v112
    %262 = vmatprep.subr.mxu0 %v109
    %263 = vmatpush1.msra.mxu0 %v108
    %264 = vmatprep.subr.mxu0 %v105
    %265 = vmatpush1.msra.mxu0 %v104
    %266 = vmatprep.subr.mxu0 %v101
    %267 = vmatpush1.msra.mxu0 %v100
    %268 = vmatprep.subr.mxu0 %v97
    %269 = vmatpush1.msra.mxu0 %v96
    %270 = vmatprep.subr.mxu0 %v93
    %271 = vmatpush1.msra.mxu0 %v92
    %272 = vmatprep.subr.mxu0 %v89
    %273 = vmatpush1.msra.mxu0 %v88
    %274 = vmatprep.subr.mxu0 %v85
    %275 = vmatpush1.msra.mxu0 %v84
    %276 = vmatprep.subr.mxu0 0.0
    %277 = vmatpush2.msra.mxu0 0.0
    %278 = vmatprep.subr.mxu0 0.0
    %279 = vmatpush2.msra.mxu0 0.0
    %280 = vmatprep.subr.mxu0 0.0
    %281 = vmatpush2.msra.mxu0 0.0
    %282 = vmatprep.subr.mxu0 0.0
    %283 = vmatpush2.msra.mxu0 0.0
    %284 = vmatprep.subr.mxu0 0.0
    %285 = vmatpush2.msra.mxu0 0.0
    %286 = vmatprep.subr.mxu0 0.0
    %287 = vmatpush2.msra.mxu0 0.0
    %288 = vmatprep.subr.mxu0 0.0
    %289 = vmatpush2.msra.mxu0 0.0
    %290 = vmatprep.subr.mxu0 0.0
    %291 = vmatpush2.msra.mxu0 0.0
    %292 = vmatprep.subr.mxu0 0.0
    %293 = vmatpush2.msra.mxu0 0.0
    %294 = vmatprep.subr.mxu0 0.0
    %295 = vmatpush2.msra.mxu0 0.0
    %296 = vmatprep.subr.mxu0 0.0
    %297 = vmatpush2.msra.mxu0 0.0
    %298 = vmatprep.subr.mxu0 0.0
    %299 = vmatpush2.msra.mxu0 0.0
    %300 = vmatprep.subr.mxu0 0.0
    %301 = vmatpush2.msra.mxu0 0.0
    %302 = vmatprep.subr.mxu0 0.0
    %303 = vmatpush2.msra.mxu0 0.0
    %304 = vmatprep.subr.mxu0 0.0
    %305 = vmatpush2.msra.mxu0 0.0
    %306 = vmatprep.subr.mxu0 0.0
    %307 = vmatpush2.msra.mxu0 0.0
    %308 = vmatprep.mubr.f32.mxu0 0.0
    %309 = vmatmul.mubr.f32.gmra.mxu0 %v68
    %v310 = vpop.f32.mrf.mxu0
    %v311 = vadd.f32 %v167, %v310
    %v312 = vpop.f32.mrf.mxu0
    %v313 = vadd.f32 %v167, %v312
    %314 = vmatprep.mubr.f32.mxu0 0.0
    %315 = vmatmul.mubr.f32.gmra.mxu0 %v69
    %v316 = vpop.f32.mrf.mxu0
    %v317 = vadd.f32 %v172, %v316
    %v318 = vpop.f32.mrf.mxu0
    %v319 = vadd.f32 %v172, %v318
    %320 = vmatprep.mubr.f32.mxu0 0.0
    %321 = vmatmul.mubr.f32.gmra.mxu0 %v70
    %v322 = vpop.f32.mrf.mxu0
    %v323 = vadd.f32 %v177, %v322
    %v324 = vpop.f32.mrf.mxu0
    %v325 = vadd.f32 %v177, %v324
    %326 = vmatprep.mubr.f32.mxu0 0.0
    %327 = vmatmul.mubr.f32.gmra.mxu0 %v71
    %v328 = vpop.f32.mrf.mxu0
    %v329 = vadd.f32 %v182, %v328
    %v330 = vpop.f32.mrf.mxu0
    %v331 = vadd.f32 %v182, %v330
    %332 = vmatprep.mubr.f32.mxu0 0.0
    %333 = vmatmul.mubr.f32.gmra.mxu0 %v72
    %v334 = vpop.f32.mrf.mxu0
    %v335 = vadd.f32 %v187, %v334
    %v336 = vpop.f32.mrf.mxu0
    %v337 = vadd.f32 %v187, %v336
    %338 = vmatprep.mubr.f32.mxu0 0.0
    %339 = vmatmul.mubr.f32.gmra.mxu0 %v73
    %v340 = vpop.f32.mrf.mxu0
    %v341 = vadd.f32 %v192, %v340
    %v342 = vpop.f32.mrf.mxu0
    %v343 = vadd.f32 %v192, %v342
    %344 = vmatprep.mubr.f32.mxu0 0.0
    %345 = vmatmul.mubr.f32.gmra.mxu0 %v74
    %v346 = vpop.f32.mrf.mxu0
    %v347 = vadd.f32 %v197, %v346
    %v348 = vpop.f32.mrf.mxu0
    %v349 = vadd.f32 %v197, %v348
    %350 = vmatprep.mubr.f32.mxu0 0.0
    %351 = vmatmul.mubr.f32.gmra.mxu0 %v75
    %v352 = vpop.f32.mrf.mxu0
    %v353 = vadd.f32 %v202, %v352
    %v354 = vpop.f32.mrf.mxu0
    %v355 = vadd.f32 %v202, %v354
    %356 = vmatprep.mubr.f32.mxu0 0.0
    %357 = vmatmul.mubr.f32.gmra.mxu0 %v76
    %v358 = vpop.f32.mrf.mxu0
    %v359 = vadd.f32 %v207, %v358
    %v360 = vpop.f32.mrf.mxu0
    %v361 = vadd.f32 %v207, %v360
    %362 = vmatprep.mubr.f32.mxu0 0.0
    %363 = vmatmul.mubr.f32.gmra.mxu0 %v77
    %v364 = vpop.f32.mrf.mxu0
    %v365 = vadd.f32 %v212, %v364
    %v366 = vpop.f32.mrf.mxu0
    %v367 = vadd.f32 %v212, %v366
    %368 = vmatprep.mubr.f32.mxu0 0.0
    %369 = vmatmul.mubr.f32.gmra.mxu0 %v78
    %v370 = vpop.f32.mrf.mxu0
    %v371 = vadd.f32 %v217, %v370
    %v372 = vpop.f32.mrf.mxu0
    %v373 = vadd.f32 %v217, %v372
    %374 = vmatprep.mubr.f32.mxu0 0.0
    %375 = vmatmul.mubr.f32.gmra.mxu0 %v79
    %v376 = vpop.f32.mrf.mxu0
    %v377 = vadd.f32 %v222, %v376
    %v378 = vpop.f32.mrf.mxu0
    %v379 = vadd.f32 %v222, %v378
    %380 = vmatprep.mubr.f32.mxu0 0.0
    %381 = vmatmul.mubr.f32.gmra.mxu0 %v80
    %v382 = vpop.f32.mrf.mxu0
    %v383 = vadd.f32 %v227, %v382
    %v384 = vpop.f32.mrf.mxu0
    %v385 = vadd.f32 %v227, %v384
    %386 = vmatprep.mubr.f32.mxu0 0.0
    %387 = vmatmul.mubr.f32.gmra.mxu0 %v81
    %v388 = vpop.f32.mrf.mxu0
    %v389 = vadd.f32 %v232, %v388
    %v390 = vpop.f32.mrf.mxu0
    %v391 = vadd.f32 %v232, %v390
    %392 = vmatprep.mubr.f32.mxu0 0.0
    %393 = vmatmul.mubr.f32.gmra.mxu0 %v82
    %v394 = vpop.f32.mrf.mxu0
    %v395 = vadd.f32 %v237, %v394
    %v396 = vpop.f32.mrf.mxu0
    %v397 = vadd.f32 %v237, %v396
    %398 = vmatprep.mubr.f32.mxu0 0.0
    %399 = vmatmul.mubr.f32.gmra.mxu0 %v83
    %v400 = vpop.f32.mrf.mxu0
    %v401 = vadd.f32 %v242, %v400
    %v402 = vpop.f32.mrf.mxu0
    %v403 = vadd.f32 %v242, %v402
    %404 = vdwg.mxu0
    %405 = vmatprep.subr.mxu0 %v147
    %406 = vmatpush1.msra.mxu0 %v146
    %407 = vmatprep.subr.mxu0 %v143
    %408 = vmatpush1.msra.mxu0 %v142
    %409 = vmatprep.subr.mxu0 %v139
    %410 = vmatpush1.msra.mxu0 %v138
    %411 = vmatprep.subr.mxu0 %v135
    %412 = vmatpush1.msra.mxu0 %v134
    %413 = vmatprep.subr.mxu0 %v131
    %414 = vmatpush1.msra.mxu0 %v130
    %415 = vmatprep.subr.mxu0 %v127
    %416 = vmatpush1.msra.mxu0 %v126
    %417 = vmatprep.subr.mxu0 %v123
    %418 = vmatpush1.msra.mxu0 %v122
    %419 = vmatprep.subr.mxu0 %v119
    %420 = vmatpush1.msra.mxu0 %v118
    %421 = vmatprep.subr.mxu0 %v115
    %422 = vmatpush1.msra.mxu0 %v114
    %423 = vmatprep.subr.mxu0 %v111
    %424 = vmatpush1.msra.mxu0 %v110
    %425 = vmatprep.subr.mxu0 %v107
    %426 = vmatpush1.msra.mxu0 %v106
    %427 = vmatprep.subr.mxu0 %v103
    %428 = vmatpush1.msra.mxu0 %v102
    %429 = vmatprep.subr.mxu0 %v99
    %430 = vmatpush1.msra.mxu0 %v98
    %431 = vmatprep.subr.mxu0 %v95
    %432 = vmatpush1.msra.mxu0 %v94
    %433 = vmatprep.subr.mxu0 %v91
    %434 = vmatpush1.msra.mxu0 %v90
    %435 = vmatprep.subr.mxu0 %v87
    %436 = vmatpush1.msra.mxu0 %v86
    %437 = vmatprep.subr.mxu0 0.0
    %438 = vmatpush2.msra.mxu0 0.0
    %439 = vmatprep.subr.mxu0 0.0
    %440 = vmatpush2.msra.mxu0 0.0
    %441 = vmatprep.subr.mxu0 0.0
    %442 = vmatpush2.msra.mxu0 0.0
    %443 = vmatprep.subr.mxu0 0.0
    %444 = vmatpush2.msra.mxu0 0.0
    %445 = vmatprep.subr.mxu0 0.0
    %446 = vmatpush2.msra.mxu0 0.0
    %447 = vmatprep.subr.mxu0 0.0
    %448 = vmatpush2.msra.mxu0 0.0
    %449 = vmatprep.subr.mxu0 0.0
    %450 = vmatpush2.msra.mxu0 0.0
    %451 = vmatprep.subr.mxu0 0.0
    %452 = vmatpush2.msra.mxu0 0.0
    %453 = vmatprep.subr.mxu0 0.0
    %454 = vmatpush2.msra.mxu0 0.0
    %455 = vmatprep.subr.mxu0 0.0
    %456 = vmatpush2.msra.mxu0 0.0
    %457 = vmatprep.subr.mxu0 0.0
    %458 = vmatpush2.msra.mxu0 0.0
    %459 = vmatprep.subr.mxu0 0.0
    %460 = vmatpush2.msra.mxu0 0.0
    %461 = vmatprep.subr.mxu0 0.0
    %462 = vmatpush2.msra.mxu0 0.0
    %463 = vmatprep.subr.mxu0 0.0
    %464 = vmatpush2.msra.mxu0 0.0
    %465 = vmatprep.subr.mxu0 0.0
    %466 = vmatpush2.msra.mxu0 0.0
    %467 = vmatprep.subr.mxu0 0.0
    %468 = vmatpush2.msra.mxu0 0.0
    %469 = vmatprep.mubr.f32.mxu0 0.0
    %470 = vmatmul.mubr.f32.gmra.mxu0 %v68
    %v471 = vpop.f32.mrf.mxu0
    %v472 = vadd.f32 %v167, %v471
    %v473 = vpop.f32.mrf.mxu0
    %v474 = vadd.f32 %v167, %v473
    %475 = vmatprep.mubr.f32.mxu0 0.0
    %476 = vmatmul.mubr.f32.gmra.mxu0 %v69
    %v477 = vpop.f32.mrf.mxu0
    %v478 = vadd.f32 %v172, %v477
    %v479 = vpop.f32.mrf.mxu0
    %v480 = vadd.f32 %v172, %v479
    %481 = vmatprep.mubr.f32.mxu0 0.0
    %482 = vmatmul.mubr.f32.gmra.mxu0 %v70
    %v483 = vpop.f32.mrf.mxu0
    %v484 = vadd.f32 %v177, %v483
    %v485 = vpop.f32.mrf.mxu0
    %v486 = vadd.f32 %v177, %v485
    %487 = vmatprep.mubr.f32.mxu0 0.0
    %488 = vmatmul.mubr.f32.gmra.mxu0 %v71
    %v489 = vpop.f32.mrf.mxu0
    %v490 = vadd.f32 %v182, %v489
    %v491 = vpop.f32.mrf.mxu0
    %v492 = vadd.f32 %v182, %v491
    %493 = vmatprep.mubr.f32.mxu0 0.0
    %494 = vmatmul.mubr.f32.gmra.mxu0 %v72
    %v495 = vpop.f32.mrf.mxu0
    %v496 = vadd.f32 %v187, %v495
    %v497 = vpop.f32.mrf.mxu0
    %v498 = vadd.f32 %v187, %v497
    %499 = vmatprep.mubr.f32.mxu0 0.0
    %500 = vmatmul.mubr.f32.gmra.mxu0 %v73
    %v501 = vpop.f32.mrf.mxu0
    %v502 = vadd.f32 %v192, %v501
    %v503 = vpop.f32.mrf.mxu0
    %v504 = vadd.f32 %v192, %v503
    %505 = vmatprep.mubr.f32.mxu0 0.0
    %506 = vmatmul.mubr.f32.gmra.mxu0 %v74
    %v507 = vpop.f32.mrf.mxu0
    %v508 = vadd.f32 %v197, %v507
    %v509 = vpop.f32.mrf.mxu0
    %v510 = vadd.f32 %v197, %v509
    %511 = vmatprep.mubr.f32.mxu0 0.0
    %512 = vmatmul.mubr.f32.gmra.mxu0 %v75
    %v513 = vpop.f32.mrf.mxu0
    %v514 = vadd.f32 %v202, %v513
    %v515 = vpop.f32.mrf.mxu0
    %v516 = vadd.f32 %v202, %v515
    %517 = vmatprep.mubr.f32.mxu0 0.0
    %518 = vmatmul.mubr.f32.gmra.mxu0 %v76
    %v519 = vpop.f32.mrf.mxu0
    %v520 = vadd.f32 %v207, %v519
    %v521 = vpop.f32.mrf.mxu0
    %v522 = vadd.f32 %v207, %v521
    %523 = vmatprep.mubr.f32.mxu0 0.0
    %524 = vmatmul.mubr.f32.gmra.mxu0 %v77
    %v525 = vpop.f32.mrf.mxu0
    %v526 = vadd.f32 %v212, %v525
    %v527 = vpop.f32.mrf.mxu0
    %v528 = vadd.f32 %v212, %v527
    %529 = vmatprep.mubr.f32.mxu0 0.0
    %530 = vmatmul.mubr.f32.gmra.mxu0 %v78
    %v531 = vpop.f32.mrf.mxu0
    %v532 = vadd.f32 %v217, %v531
    %v533 = vpop.f32.mrf.mxu0
    %v534 = vadd.f32 %v217, %v533
    %535 = vmatprep.mubr.f32.mxu0 0.0
    %536 = vmatmul.mubr.f32.gmra.mxu0 %v79
    %v537 = vpop.f32.mrf.mxu0
    %v538 = vadd.f32 %v222, %v537
    %v539 = vpop.f32.mrf.mxu0
    %v540 = vadd.f32 %v222, %v539
    %541 = vmatprep.mubr.f32.mxu0 0.0
    %542 = vmatmul.mubr.f32.gmra.mxu0 %v80
    %v543 = vpop.f32.mrf.mxu0
    %v544 = vadd.f32 %v227, %v543
    %v545 = vpop.f32.mrf.mxu0
    %v546 = vadd.f32 %v227, %v545
    %547 = vmatprep.mubr.f32.mxu0 0.0
    %548 = vmatmul.mubr.f32.gmra.mxu0 %v81
    %v549 = vpop.f32.mrf.mxu0
    %v550 = vadd.f32 %v232, %v549
    %v551 = vpop.f32.mrf.mxu0
    %v552 = vadd.f32 %v232, %v551
    %553 = vmatprep.mubr.f32.mxu0 0.0
    %554 = vmatmul.mubr.f32.gmra.mxu0 %v82
    %v555 = vpop.f32.mrf.mxu0
    %v556 = vadd.f32 %v237, %v555
    %v557 = vpop.f32.mrf.mxu0
    %v558 = vadd.f32 %v237, %v557
    %559 = vmatprep.mubr.f32.mxu0 0.0
    %560 = vmatmul.mubr.f32.gmra.mxu0 %v83
    %v561 = vpop.f32.mrf.mxu0
    %v562 = vadd.f32 %v242, %v561
    %v563 = vpop.f32.mrf.mxu0
    %v564 = vadd.f32 %v242, %v563
    %565 = vdwg.mxu0
    %v567 = vlaneseq
    %v568 = vshrl.u32 %v567, 7
    %v569 = vsub.s32 0, %v568
    %v570 = vrot.slane %v67, %v569
    %v571 = vlaneseq
    %v572 = vshrl.u32 %v571, 7
    %v573 = vsub.s32 1, %v572
    %v574 = vrot.slane %v67, %v573
    %v575 = vlaneseq
    %v576 = vshrl.u32 %v575, 7
    %v577 = vsub.s32 2, %v576
    %v578 = vrot.slane %v67, %v577
    %v579 = vlaneseq
    %v580 = vshrl.u32 %v579, 7
    %v581 = vsub.s32 3, %v580
    %v582 = vrot.slane %v67, %v581
    %v587 = vmul.f32 %v311, %v570
    %v588 = vmul.f32 %v313, %v574
    %v589 = vmul.f32 %v472, %v578
    %v590 = vmul.f32 %v474, %v582
    %v591 = vmul.f32 %v317, %v570
    %v592 = vmul.f32 %v319, %v574
    %v593 = vmul.f32 %v478, %v578
    %v594 = vmul.f32 %v480, %v582
    %v595 = vmul.f32 %v323, %v570
    %v596 = vmul.f32 %v325, %v574
    %v597 = vmul.f32 %v484, %v578
    %v598 = vmul.f32 %v486, %v582
    %v599 = vmul.f32 %v329, %v570
    %v600 = vmul.f32 %v331, %v574
    %v601 = vmul.f32 %v490, %v578
    %v602 = vmul.f32 %v492, %v582
    %v603 = vmul.f32 %v335, %v570
    %v604 = vmul.f32 %v337, %v574
    %v605 = vmul.f32 %v496, %v578
    %v606 = vmul.f32 %v498, %v582
    %v607 = vmul.f32 %v341, %v570
    %v608 = vmul.f32 %v343, %v574
    %v609 = vmul.f32 %v502, %v578
    %v610 = vmul.f32 %v504, %v582
    %v611 = vmul.f32 %v347, %v570
    %v612 = vmul.f32 %v349, %v574
    %v613 = vmul.f32 %v508, %v578
    %v614 = vmul.f32 %v510, %v582
    %v615 = vmul.f32 %v353, %v570
    %v616 = vmul.f32 %v355, %v574
    %v617 = vmul.f32 %v514, %v578
    %v618 = vmul.f32 %v516, %v582
    %v619 = vmul.f32 %v359, %v570
    %v620 = vmul.f32 %v361, %v574
    %v621 = vmul.f32 %v520, %v578
    %v622 = vmul.f32 %v522, %v582
    %v623 = vmul.f32 %v365, %v570
    %v624 = vmul.f32 %v367, %v574
    %v625 = vmul.f32 %v526, %v578
    %v626 = vmul.f32 %v528, %v582
    %v627 = vmul.f32 %v371, %v570
    %v628 = vmul.f32 %v373, %v574
    %v629 = vmul.f32 %v532, %v578
    %v630 = vmul.f32 %v534, %v582
    %v631 = vmul.f32 %v377, %v570
    %v632 = vmul.f32 %v379, %v574
    %v633 = vmul.f32 %v538, %v578
    %v634 = vmul.f32 %v540, %v582
    %v635 = vmul.f32 %v383, %v570
    %v636 = vmul.f32 %v385, %v574
    %v637 = vmul.f32 %v544, %v578
    %v638 = vmul.f32 %v546, %v582
    %v639 = vmul.f32 %v389, %v570
    %v640 = vmul.f32 %v391, %v574
    %v641 = vmul.f32 %v550, %v578
    %v642 = vmul.f32 %v552, %v582
    %v643 = vmul.f32 %v395, %v570
    %v644 = vmul.f32 %v397, %v574
    %v645 = vmul.f32 %v556, %v578
    %v646 = vmul.f32 %v558, %v582
    %v647 = vmul.f32 %v401, %v570
    %v648 = vmul.f32 %v403, %v574
    %v649 = vmul.f32 %v562, %v578
    %v650 = vmul.f32 %v564, %v582
    %v651 = vadd.f32 %v587, %v588
    %v652 = vadd.f32 %v651, %v589
    %v653 = vadd.f32 %v652, %v590
    %654 = vadd.xlane.f32.xlu0 %v653
    %v655 = vpop.xlane.xlu0 %654
    %v656 = vadd.f32 %v591, %v592
    %v657 = vadd.f32 %v656, %v593
    %v658 = vadd.f32 %v657, %v594
    %659 = vadd.xlane.f32.xlu0 %v658
    %v660 = vpop.xlane.xlu0 %659
    %v661 = vadd.f32 %v595, %v596
    %v662 = vadd.f32 %v661, %v597
    %v663 = vadd.f32 %v662, %v598
    %664 = vadd.xlane.f32.xlu0 %v663
    %v665 = vpop.xlane.xlu0 %664
    %v666 = vadd.f32 %v599, %v600
    %v667 = vadd.f32 %v666, %v601
    %v668 = vadd.f32 %v667, %v602
    %669 = vadd.xlane.f32.xlu0 %v668
    %v670 = vpop.xlane.xlu0 %669
    %v671 = vadd.f32 %v603, %v604
    %v672 = vadd.f32 %v671, %v605
    %v673 = vadd.f32 %v672, %v606
    %674 = vadd.xlane.f32.xlu0 %v673
    %v675 = vpop.xlane.xlu0 %674
    %v676 = vadd.f32 %v607, %v608
    %v677 = vadd.f32 %v676, %v609
    %v678 = vadd.f32 %v677, %v610
    %679 = vadd.xlane.f32.xlu0 %v678
    %v680 = vpop.xlane.xlu0 %679
    %v681 = vadd.f32 %v611, %v612
    %v682 = vadd.f32 %v681, %v613
    %v683 = vadd.f32 %v682, %v614
    %684 = vadd.xlane.f32.xlu0 %v683
    %v685 = vpop.xlane.xlu0 %684
    %v686 = vadd.f32 %v615, %v616
    %v687 = vadd.f32 %v686, %v617
    %v688 = vadd.f32 %v687, %v618
    %689 = vadd.xlane.f32.xlu0 %v688
    %v690 = vpop.xlane.xlu0 %689
    %v691 = vadd.f32 %v619, %v620
    %v692 = vadd.f32 %v691, %v621
    %v693 = vadd.f32 %v692, %v622
    %694 = vadd.xlane.f32.xlu0 %v693
    %v695 = vpop.xlane.xlu0 %694
    %v696 = vadd.f32 %v623, %v624
    %v697 = vadd.f32 %v696, %v625
    %v698 = vadd.f32 %v697, %v626
    %699 = vadd.xlane.f32.xlu0 %v698
    %v700 = vpop.xlane.xlu0 %699
    %v701 = vadd.f32 %v627, %v628
    %v702 = vadd.f32 %v701, %v629
    %v703 = vadd.f32 %v702, %v630
    %704 = vadd.xlane.f32.xlu0 %v703
    %v705 = vpop.xlane.xlu0 %704
    %v706 = vadd.f32 %v631, %v632
    %v707 = vadd.f32 %v706, %v633
    %v708 = vadd.f32 %v707, %v634
    %709 = vadd.xlane.f32.xlu0 %v708
    %v710 = vpop.xlane.xlu0 %709
    %v711 = vadd.f32 %v635, %v636
    %v712 = vadd.f32 %v711, %v637
    %v713 = vadd.f32 %v712, %v638
    %714 = vadd.xlane.f32.xlu0 %v713
    %v715 = vpop.xlane.xlu0 %714
    %v716 = vadd.f32 %v639, %v640
    %v717 = vadd.f32 %v716, %v641
    %v718 = vadd.f32 %v717, %v642
    %719 = vadd.xlane.f32.xlu0 %v718
    %v720 = vpop.xlane.xlu0 %719
    %v721 = vadd.f32 %v643, %v644
    %v722 = vadd.f32 %v721, %v645
    %v723 = vadd.f32 %v722, %v646
    %724 = vadd.xlane.f32.xlu0 %v723
    %v725 = vpop.xlane.xlu0 %724
    %v726 = vadd.f32 %v647, %v648
    %v727 = vadd.f32 %v726, %v649
    %v728 = vadd.f32 %v727, %v650
    %729 = vadd.xlane.f32.xlu0 %v728
    %v730 = vpop.xlane.xlu0 %729
    %v731 = vmul.f32 %v655, 0.001953125
    %v732 = vmul.f32 %v660, 0.001953125
    %v733 = vmul.f32 %v665, 0.001953125
    %v734 = vmul.f32 %v670, 0.001953125
    %v735 = vmul.f32 %v675, 0.001953125
    %v736 = vmul.f32 %v680, 0.001953125
    %v737 = vmul.f32 %v685, 0.001953125
    %v738 = vmul.f32 %v690, 0.001953125
    %v739 = vmul.f32 %v695, 0.001953125
    %v740 = vmul.f32 %v700, 0.001953125
    %v741 = vmul.f32 %v705, 0.001953125
    %v742 = vmul.f32 %v710, 0.001953125
    %v743 = vmul.f32 %v715, 0.001953125
    %v744 = vmul.f32 %v720, 0.001953125
    %v745 = vmul.f32 %v725, 0.001953125
    %v746 = vmul.f32 %v730, 0.001953125
    %v747 = vsub.f32 %v311, %v731
    %v748 = vsub.f32 %v313, %v731
    %v749 = vsub.f32 %v472, %v731
    %v750 = vsub.f32 %v474, %v731
    %v751 = vsub.f32 %v317, %v732
    %v752 = vsub.f32 %v319, %v732
    %v753 = vsub.f32 %v478, %v732
    %v754 = vsub.f32 %v480, %v732
    %v755 = vsub.f32 %v323, %v733
    %v756 = vsub.f32 %v325, %v733
    %v757 = vsub.f32 %v484, %v733
    %v758 = vsub.f32 %v486, %v733
    %v759 = vsub.f32 %v329, %v734
    %v760 = vsub.f32 %v331, %v734
    %v761 = vsub.f32 %v490, %v734
    %v762 = vsub.f32 %v492, %v734
    %v763 = vsub.f32 %v335, %v735
    %v764 = vsub.f32 %v337, %v735
    %v765 = vsub.f32 %v496, %v735
    %v766 = vsub.f32 %v498, %v735
    %v767 = vsub.f32 %v341, %v736
    %v768 = vsub.f32 %v343, %v736
    %v769 = vsub.f32 %v502, %v736
    %v770 = vsub.f32 %v504, %v736
    %v771 = vsub.f32 %v347, %v737
    %v772 = vsub.f32 %v349, %v737
    %v773 = vsub.f32 %v508, %v737
    %v774 = vsub.f32 %v510, %v737
    %v775 = vsub.f32 %v353, %v738
    %v776 = vsub.f32 %v355, %v738
    %v777 = vsub.f32 %v514, %v738
    %v778 = vsub.f32 %v516, %v738
    %v779 = vsub.f32 %v359, %v739
    %v780 = vsub.f32 %v361, %v739
    %v781 = vsub.f32 %v520, %v739
    %v782 = vsub.f32 %v522, %v739
    %v783 = vsub.f32 %v365, %v740
    %v784 = vsub.f32 %v367, %v740
    %v785 = vsub.f32 %v526, %v740
    %v786 = vsub.f32 %v528, %v740
    %v787 = vsub.f32 %v371, %v741
    %v788 = vsub.f32 %v373, %v741
    %v789 = vsub.f32 %v532, %v741
    %v790 = vsub.f32 %v534, %v741
    %v791 = vsub.f32 %v377, %v742
    %v792 = vsub.f32 %v379, %v742
    %v793 = vsub.f32 %v538, %v742
    %v794 = vsub.f32 %v540, %v742
    %v795 = vsub.f32 %v383, %v743
    %v796 = vsub.f32 %v385, %v743
    %v797 = vsub.f32 %v544, %v743
    %v798 = vsub.f32 %v546, %v743
    %v799 = vsub.f32 %v389, %v744
    %v800 = vsub.f32 %v391, %v744
    %v801 = vsub.f32 %v550, %v744
    %v802 = vsub.f32 %v552, %v744
    %v803 = vsub.f32 %v395, %v745
    %v804 = vsub.f32 %v397, %v745
    %v805 = vsub.f32 %v556, %v745
    %v806 = vsub.f32 %v558, %v745
    %v807 = vsub.f32 %v401, %v746
    %v808 = vsub.f32 %v403, %v746
    %v809 = vsub.f32 %v562, %v746
    %v810 = vsub.f32 %v564, %v746
    %v811 = vmul.f32 %v747, %v747
    %v812 = vmul.f32 %v748, %v748
    %v813 = vmul.f32 %v749, %v749
    %v814 = vmul.f32 %v750, %v750
    %v815 = vmul.f32 %v751, %v751
    %v816 = vmul.f32 %v752, %v752
    %v817 = vmul.f32 %v753, %v753
    %v818 = vmul.f32 %v754, %v754
    %v819 = vmul.f32 %v755, %v755
    %v820 = vmul.f32 %v756, %v756
    %v821 = vmul.f32 %v757, %v757
    %v822 = vmul.f32 %v758, %v758
    %v823 = vmul.f32 %v759, %v759
    %v824 = vmul.f32 %v760, %v760
    %v825 = vmul.f32 %v761, %v761
    %v826 = vmul.f32 %v762, %v762
    %v827 = vmul.f32 %v763, %v763
    %v828 = vmul.f32 %v764, %v764
    %v829 = vmul.f32 %v765, %v765
    %v830 = vmul.f32 %v766, %v766
    %v831 = vmul.f32 %v767, %v767
    %v832 = vmul.f32 %v768, %v768
    %v833 = vmul.f32 %v769, %v769
    %v834 = vmul.f32 %v770, %v770
    %v835 = vmul.f32 %v771, %v771
    %v836 = vmul.f32 %v772, %v772
    %v837 = vmul.f32 %v773, %v773
    %v838 = vmul.f32 %v774, %v774
    %v839 = vmul.f32 %v775, %v775
    %v840 = vmul.f32 %v776, %v776
    %v841 = vmul.f32 %v777, %v777
    %v842 = vmul.f32 %v778, %v778
    %v843 = vmul.f32 %v779, %v779
    %v844 = vmul.f32 %v780, %v780
    %v845 = vmul.f32 %v781, %v781
    %v846 = vmul.f32 %v782, %v782
    %v847 = vmul.f32 %v783, %v783
    %v848 = vmul.f32 %v784, %v784
    %v849 = vmul.f32 %v785, %v785
    %v850 = vmul.f32 %v786, %v786
    %v851 = vmul.f32 %v787, %v787
    %v852 = vmul.f32 %v788, %v788
    %v853 = vmul.f32 %v789, %v789
    %v854 = vmul.f32 %v790, %v790
    %v855 = vmul.f32 %v791, %v791
    %v856 = vmul.f32 %v792, %v792
    %v857 = vmul.f32 %v793, %v793
    %v858 = vmul.f32 %v794, %v794
    %v859 = vmul.f32 %v795, %v795
    %v860 = vmul.f32 %v796, %v796
    %v861 = vmul.f32 %v797, %v797
    %v862 = vmul.f32 %v798, %v798
    %v863 = vmul.f32 %v799, %v799
    %v864 = vmul.f32 %v800, %v800
    %v865 = vmul.f32 %v801, %v801
    %v866 = vmul.f32 %v802, %v802
    %v867 = vmul.f32 %v803, %v803
    %v868 = vmul.f32 %v804, %v804
    %v869 = vmul.f32 %v805, %v805
    %v870 = vmul.f32 %v806, %v806
    %v871 = vmul.f32 %v807, %v807
    %v872 = vmul.f32 %v808, %v808
    %v873 = vmul.f32 %v809, %v809
    %v874 = vmul.f32 %v810, %v810
    %v875 = vmul.f32 %v811, %v570
    %v876 = vmul.f32 %v812, %v574
    %v877 = vmul.f32 %v813, %v578
    %v878 = vmul.f32 %v814, %v582
    %v879 = vmul.f32 %v815, %v570
    %v880 = vmul.f32 %v816, %v574
    %v881 = vmul.f32 %v817, %v578
    %v882 = vmul.f32 %v818, %v582
    %v883 = vmul.f32 %v819, %v570
    %v884 = vmul.f32 %v820, %v574
    %v885 = vmul.f32 %v821, %v578
    %v886 = vmul.f32 %v822, %v582
    %v887 = vmul.f32 %v823, %v570
    %v888 = vmul.f32 %v824, %v574
    %v889 = vmul.f32 %v825, %v578
    %v890 = vmul.f32 %v826, %v582
    %v891 = vmul.f32 %v827, %v570
    %v892 = vmul.f32 %v828, %v574
    %v893 = vmul.f32 %v829, %v578
    %v894 = vmul.f32 %v830, %v582
    %v895 = vmul.f32 %v831, %v570
    %v896 = vmul.f32 %v832, %v574
    %v897 = vmul.f32 %v833, %v578
    %v898 = vmul.f32 %v834, %v582
    %v899 = vmul.f32 %v835, %v570
    %v900 = vmul.f32 %v836, %v574
    %v901 = vmul.f32 %v837, %v578
    %v902 = vmul.f32 %v838, %v582
    %v903 = vmul.f32 %v839, %v570
    %v904 = vmul.f32 %v840, %v574
    %v905 = vmul.f32 %v841, %v578
    %v906 = vmul.f32 %v842, %v582
    %v907 = vmul.f32 %v843, %v570
    %v908 = vmul.f32 %v844, %v574
    %v909 = vmul.f32 %v845, %v578
    %v910 = vmul.f32 %v846, %v582
    %v911 = vmul.f32 %v847, %v570
    %v912 = vmul.f32 %v848, %v574
    %v913 = vmul.f32 %v849, %v578
    %v914 = vmul.f32 %v850, %v582
    %v915 = vmul.f32 %v851, %v570
    %v916 = vmul.f32 %v852, %v574
    %v917 = vmul.f32 %v853, %v578
    %v918 = vmul.f32 %v854, %v582
    %v919 = vmul.f32 %v855, %v570
    %v920 = vmul.f32 %v856, %v574
    %v921 = vmul.f32 %v857, %v578
    %v922 = vmul.f32 %v858, %v582
    %v923 = vmul.f32 %v859, %v570
    %v924 = vmul.f32 %v860, %v574
    %v925 = vmul.f32 %v861, %v578
    %v926 = vmul.f32 %v862, %v582
    %v927 = vmul.f32 %v863, %v570
    %v928 = vmul.f32 %v864, %v574
    %v929 = vmul.f32 %v865, %v578
    %v930 = vmul.f32 %v866, %v582
    %v931 = vmul.f32 %v867, %v570
    %v932 = vmul.f32 %v868, %v574
    %v933 = vmul.f32 %v869, %v578
    %v934 = vmul.f32 %v870, %v582
    %v935 = vmul.f32 %v871, %v570
    %v936 = vmul.f32 %v872, %v574
    %v937 = vmul.f32 %v873, %v578
    %v938 = vmul.f32 %v874, %v582
    %v939 = vadd.f32 %v875, %v876
    %v940 = vadd.f32 %v939, %v877
    %v941 = vadd.f32 %v940, %v878
    %942 = vadd.xlane.f32.xlu0 %v941
    %v943 = vpop.xlane.xlu0 %942
    %v944 = vadd.f32 %v879, %v880
    %v945 = vadd.f32 %v944, %v881
    %v946 = vadd.f32 %v945, %v882
    %947 = vadd.xlane.f32.xlu0 %v946
    %v948 = vpop.xlane.xlu0 %947
    %v949 = vadd.f32 %v883, %v884
    %v950 = vadd.f32 %v949, %v885
    %v951 = vadd.f32 %v950, %v886
    %952 = vadd.xlane.f32.xlu0 %v951
    %v953 = vpop.xlane.xlu0 %952
    %v954 = vadd.f32 %v887, %v888
    %v955 = vadd.f32 %v954, %v889
    %v956 = vadd.f32 %v955, %v890
    %957 = vadd.xlane.f32.xlu0 %v956
    %v958 = vpop.xlane.xlu0 %957
    %v959 = vadd.f32 %v891, %v892
    %v960 = vadd.f32 %v959, %v893
    %v961 = vadd.f32 %v960, %v894
    %962 = vadd.xlane.f32.xlu0 %v961
    %v963 = vpop.xlane.xlu0 %962
    %v964 = vadd.f32 %v895, %v896
    %v965 = vadd.f32 %v964, %v897
    %v966 = vadd.f32 %v965, %v898
    %967 = vadd.xlane.f32.xlu0 %v966
    %v968 = vpop.xlane.xlu0 %967
    %v969 = vadd.f32 %v899, %v900
    %v970 = vadd.f32 %v969, %v901
    %v971 = vadd.f32 %v970, %v902
    %972 = vadd.xlane.f32.xlu0 %v971
    %v973 = vpop.xlane.xlu0 %972
    %v974 = vadd.f32 %v903, %v904
    %v975 = vadd.f32 %v974, %v905
    %v976 = vadd.f32 %v975, %v906
    %977 = vadd.xlane.f32.xlu0 %v976
    %v978 = vpop.xlane.xlu0 %977
    %v979 = vadd.f32 %v907, %v908
    %v980 = vadd.f32 %v979, %v909
    %v981 = vadd.f32 %v980, %v910
    %982 = vadd.xlane.f32.xlu0 %v981
    %v983 = vpop.xlane.xlu0 %982
    %v984 = vadd.f32 %v911, %v912
    %v985 = vadd.f32 %v984, %v913
    %v986 = vadd.f32 %v985, %v914
    %987 = vadd.xlane.f32.xlu0 %v986
    %v988 = vpop.xlane.xlu0 %987
    %v989 = vadd.f32 %v915, %v916
    %v990 = vadd.f32 %v989, %v917
    %v991 = vadd.f32 %v990, %v918
    %992 = vadd.xlane.f32.xlu0 %v991
    %v993 = vpop.xlane.xlu0 %992
    %v994 = vadd.f32 %v919, %v920
    %v995 = vadd.f32 %v994, %v921
    %v996 = vadd.f32 %v995, %v922
    %997 = vadd.xlane.f32.xlu0 %v996
    %v998 = vpop.xlane.xlu0 %997
    %v999 = vadd.f32 %v923, %v924
    %v1000 = vadd.f32 %v999, %v925
    %v1001 = vadd.f32 %v1000, %v926
    %1002 = vadd.xlane.f32.xlu0 %v1001
    %v1003 = vpop.xlane.xlu0 %1002
    %v1004 = vadd.f32 %v927, %v928
    %v1005 = vadd.f32 %v1004, %v929
    %v1006 = vadd.f32 %v1005, %v930
    %1007 = vadd.xlane.f32.xlu0 %v1006
    %v1008 = vpop.xlane.xlu0 %1007
    %v1009 = vadd.f32 %v931, %v932
    %v1010 = vadd.f32 %v1009, %v933
    %v1011 = vadd.f32 %v1010, %v934
    %1012 = vadd.xlane.f32.xlu0 %v1011
    %v1013 = vpop.xlane.xlu0 %1012
    %v1014 = vadd.f32 %v935, %v936
    %v1015 = vadd.f32 %v1014, %v937
    %v1016 = vadd.f32 %v1015, %v938
    %1017 = vadd.xlane.f32.xlu0 %v1016
    %v1018 = vpop.xlane.xlu0 %1017
    %v1019 = vmul.f32 %v943, 0.001953125
    %v1020 = vmul.f32 %v948, 0.001953125
    %v1021 = vmul.f32 %v953, 0.001953125
    %v1022 = vmul.f32 %v958, 0.001953125
    %v1023 = vmul.f32 %v963, 0.001953125
    %v1024 = vmul.f32 %v968, 0.001953125
    %v1025 = vmul.f32 %v973, 0.001953125
    %v1026 = vmul.f32 %v978, 0.001953125
    %v1027 = vmul.f32 %v983, 0.001953125
    %v1028 = vmul.f32 %v988, 0.001953125
    %v1029 = vmul.f32 %v993, 0.001953125
    %v1030 = vmul.f32 %v998, 0.001953125
    %v1031 = vmul.f32 %v1003, 0.001953125
    %v1032 = vmul.f32 %v1008, 0.001953125
    %v1033 = vmul.f32 %v1013, 0.001953125
    %v1034 = vmul.f32 %v1018, 0.001953125
    %v1035 = vld [vmem:[%s3] sm:$0xff]
    %v1036 = vld [vmem:[%s3 + $0x8] sm:$0xff]
    %v1037 = vld [vmem:[%s3 + $0x10] sm:$0xff]
    %v1038 = vld [vmem:[%s3 + $0x18] sm:$0xff]
    %v1039 = vld [vmem:[%s3 + $0x20] sm:$0xff]
    %v1040 = vld [vmem:[%s3 + $0x28] sm:$0xff]
    %v1041 = vld [vmem:[%s3 + $0x30] sm:$0xff]
    %v1042 = vld [vmem:[%s3 + $0x38] sm:$0xff]
    %v1043 = vld [vmem:[%s3 + $0x40] sm:$0xff]
    %v1044 = vld [vmem:[%s3 + $0x48] sm:$0xff]
    %v1045 = vld [vmem:[%s3 + $0x50] sm:$0xff]
    %v1046 = vld [vmem:[%s3 + $0x58] sm:$0xff]
    %v1047 = vld [vmem:[%s3 + $0x60] sm:$0xff]
    %v1048 = vld [vmem:[%s3 + $0x68] sm:$0xff]
    %v1049 = vld [vmem:[%s3 + $0x70] sm:$0xff]
    %v1050 = vld [vmem:[%s3 + $0x78] sm:$0xff]
    %v1051 = vadd.f32 %v1019, 1e-05
    %v1052 = vadd.f32 %v1020, 1e-05
    %v1053 = vadd.f32 %v1021, 1e-05
    %v1054 = vadd.f32 %v1022, 1e-05
    %v1055 = vadd.f32 %v1023, 1e-05
    %v1056 = vadd.f32 %v1024, 1e-05
    %v1057 = vadd.f32 %v1025, 1e-05
    %v1058 = vadd.f32 %v1026, 1e-05
    %v1059 = vadd.f32 %v1027, 1e-05
    %v1060 = vadd.f32 %v1028, 1e-05
    %v1061 = vadd.f32 %v1029, 1e-05
    %v1062 = vadd.f32 %v1030, 1e-05
    %v1063 = vadd.f32 %v1031, 1e-05
    %v1064 = vadd.f32 %v1032, 1e-05
    %v1065 = vadd.f32 %v1033, 1e-05
    %v1066 = vadd.f32 %v1034, 1e-05
    %v1067 = vrsqrt.pop %v1051
    %v1068 = vrsqrt.pop %v1052
    %v1069 = vrsqrt.pop %v1053
    %v1070 = vrsqrt.pop %v1054
    %v1071 = vrsqrt.pop %v1055
    %v1072 = vrsqrt.pop %v1056
    %v1073 = vrsqrt.pop %v1057
    %v1074 = vrsqrt.pop %v1058
    %v1075 = vrsqrt.pop %v1059
    %v1076 = vrsqrt.pop %v1060
    %v1077 = vrsqrt.pop %v1061
    %v1078 = vrsqrt.pop %v1062
    %v1079 = vrsqrt.pop %v1063
    %v1080 = vrsqrt.pop %v1064
    %v1081 = vrsqrt.pop %v1065
    %v1082 = vrsqrt.pop %v1066
    %v1083 = vmul.f32 %v1035, %v1067
    %v1084 = vmul.f32 %v1036, %v1068
    %v1085 = vmul.f32 %v1037, %v1069
    %v1086 = vmul.f32 %v1038, %v1070
    %v1087 = vmul.f32 %v1039, %v1071
    %v1088 = vmul.f32 %v1040, %v1072
    %v1089 = vmul.f32 %v1041, %v1073
    %v1090 = vmul.f32 %v1042, %v1074
    %v1091 = vmul.f32 %v1043, %v1075
    %v1092 = vmul.f32 %v1044, %v1076
    %v1093 = vmul.f32 %v1045, %v1077
    %v1094 = vmul.f32 %v1046, %v1078
    %v1095 = vmul.f32 %v1047, %v1079
    %v1096 = vmul.f32 %v1048, %v1080
    %v1097 = vmul.f32 %v1049, %v1081
    %v1098 = vmul.f32 %v1050, %v1082
    %1100 = vset.pattern.permute.xlu0 0
    %1101 = vperm.xlu0 %1100, %v1083
    %v1102 = vpop.permute.xlu0 %1101
    %1105 = vset.pattern.permute.xlu0 0
    %1106 = vperm.xlu0 %1105, %v1084
    %v1107 = vpop.permute.xlu0 %1106
    %1110 = vset.pattern.permute.xlu0 0
    %1111 = vperm.xlu0 %1110, %v1085
    %v1112 = vpop.permute.xlu0 %1111
    %1115 = vset.pattern.permute.xlu0 0
    %1116 = vperm.xlu0 %1115, %v1086
    %v1117 = vpop.permute.xlu0 %1116
    %1120 = vset.pattern.permute.xlu0 0
    %1121 = vperm.xlu0 %1120, %v1087
    %v1122 = vpop.permute.xlu0 %1121
    %1125 = vset.pattern.permute.xlu0 0
    %1126 = vperm.xlu0 %1125, %v1088
    %v1127 = vpop.permute.xlu0 %1126
    %1130 = vset.pattern.permute.xlu0 0
    %1131 = vperm.xlu0 %1130, %v1089
    %v1132 = vpop.permute.xlu0 %1131
    %1135 = vset.pattern.permute.xlu0 0
    %1136 = vperm.xlu0 %1135, %v1090
    %v1137 = vpop.permute.xlu0 %1136
    %1140 = vset.pattern.permute.xlu0 0
    %1141 = vperm.xlu0 %1140, %v1091
    %v1142 = vpop.permute.xlu0 %1141
    %1145 = vset.pattern.permute.xlu0 0
    %1146 = vperm.xlu0 %1145, %v1092
    %v1147 = vpop.permute.xlu0 %1146
    %1150 = vset.pattern.permute.xlu0 0
    %1151 = vperm.xlu0 %1150, %v1093
    %v1152 = vpop.permute.xlu0 %1151
    %1155 = vset.pattern.permute.xlu0 0
    %1156 = vperm.xlu0 %1155, %v1094
    %v1157 = vpop.permute.xlu0 %1156
    %1160 = vset.pattern.permute.xlu0 0
    %1161 = vperm.xlu0 %1160, %v1095
    %v1162 = vpop.permute.xlu0 %1161
    %1165 = vset.pattern.permute.xlu0 0
    %1166 = vperm.xlu0 %1165, %v1096
    %v1167 = vpop.permute.xlu0 %1166
    %1170 = vset.pattern.permute.xlu0 0
    %1171 = vperm.xlu0 %1170, %v1097
    %v1172 = vpop.permute.xlu0 %1171
    %1175 = vset.pattern.permute.xlu0 0
    %1176 = vperm.xlu0 %1175, %v1098
    %v1177 = vpop.permute.xlu0 %1176
    %v1179 = vmul.f32 %v747, %v1102
    %v1180 = vmul.f32 %v748, %v1102
    %v1181 = vmul.f32 %v749, %v1102
    %v1182 = vmul.f32 %v750, %v1102
    %v1183 = vmul.f32 %v751, %v1107
    %v1184 = vmul.f32 %v752, %v1107
    %v1185 = vmul.f32 %v753, %v1107
    %v1186 = vmul.f32 %v754, %v1107
    %v1187 = vmul.f32 %v755, %v1112
    %v1188 = vmul.f32 %v756, %v1112
    %v1189 = vmul.f32 %v757, %v1112
    %v1190 = vmul.f32 %v758, %v1112
    %v1191 = vmul.f32 %v759, %v1117
    %v1192 = vmul.f32 %v760, %v1117
    %v1193 = vmul.f32 %v761, %v1117
    %v1194 = vmul.f32 %v762, %v1117
    %v1195 = vmul.f32 %v763, %v1122
    %v1196 = vmul.f32 %v764, %v1122
    %v1197 = vmul.f32 %v765, %v1122
    %v1198 = vmul.f32 %v766, %v1122
    %v1199 = vmul.f32 %v767, %v1127
    %v1200 = vmul.f32 %v768, %v1127
    %v1201 = vmul.f32 %v769, %v1127
    %v1202 = vmul.f32 %v770, %v1127
    %v1203 = vmul.f32 %v771, %v1132
    %v1204 = vmul.f32 %v772, %v1132
    %v1205 = vmul.f32 %v773, %v1132
    %v1206 = vmul.f32 %v774, %v1132
    %v1207 = vmul.f32 %v775, %v1137
    %v1208 = vmul.f32 %v776, %v1137
    %v1209 = vmul.f32 %v777, %v1137
    %v1210 = vmul.f32 %v778, %v1137
    %v1211 = vmul.f32 %v779, %v1142
    %v1212 = vmul.f32 %v780, %v1142
    %v1213 = vmul.f32 %v781, %v1142
    %v1214 = vmul.f32 %v782, %v1142
    %v1215 = vmul.f32 %v783, %v1147
    %v1216 = vmul.f32 %v784, %v1147
    %v1217 = vmul.f32 %v785, %v1147
    %v1218 = vmul.f32 %v786, %v1147
    %v1219 = vmul.f32 %v787, %v1152
    %v1220 = vmul.f32 %v788, %v1152
    %v1221 = vmul.f32 %v789, %v1152
    %v1222 = vmul.f32 %v790, %v1152
    %v1223 = vmul.f32 %v791, %v1157
    %v1224 = vmul.f32 %v792, %v1157
    %v1225 = vmul.f32 %v793, %v1157
    %v1226 = vmul.f32 %v794, %v1157
    %v1227 = vmul.f32 %v795, %v1162
    %v1228 = vmul.f32 %v796, %v1162
    %v1229 = vmul.f32 %v797, %v1162
    %v1230 = vmul.f32 %v798, %v1162
    %v1231 = vmul.f32 %v799, %v1167
    %v1232 = vmul.f32 %v800, %v1167
    %v1233 = vmul.f32 %v801, %v1167
    %v1234 = vmul.f32 %v802, %v1167
    %v1235 = vmul.f32 %v803, %v1172
    %v1236 = vmul.f32 %v804, %v1172
    %v1237 = vmul.f32 %v805, %v1172
    %v1238 = vmul.f32 %v806, %v1172
    %v1239 = vmul.f32 %v807, %v1177
    %v1240 = vmul.f32 %v808, %v1177
    %v1241 = vmul.f32 %v809, %v1177
    %v1242 = vmul.f32 %v810, %v1177
    %v1243 = vld [vmem:[%s4] sm:$0xff]
    %v1244 = vld [vmem:[%s4 + $0x8] sm:$0xff]
    %v1245 = vld [vmem:[%s4 + $0x10] sm:$0xff]
    %v1246 = vld [vmem:[%s4 + $0x18] sm:$0xff]
    %v1247 = vld [vmem:[%s4 + $0x20] sm:$0xff]
    %v1248 = vld [vmem:[%s4 + $0x28] sm:$0xff]
    %v1249 = vld [vmem:[%s4 + $0x30] sm:$0xff]
    %v1250 = vld [vmem:[%s4 + $0x38] sm:$0xff]
    %v1251 = vld [vmem:[%s4 + $0x40] sm:$0xff]
    %v1252 = vld [vmem:[%s4 + $0x48] sm:$0xff]
    %v1253 = vld [vmem:[%s4 + $0x50] sm:$0xff]
    %v1254 = vld [vmem:[%s4 + $0x58] sm:$0xff]
    %v1255 = vld [vmem:[%s4 + $0x60] sm:$0xff]
    %v1256 = vld [vmem:[%s4 + $0x68] sm:$0xff]
    %v1257 = vld [vmem:[%s4 + $0x70] sm:$0xff]
    %v1258 = vld [vmem:[%s4 + $0x78] sm:$0xff]
    %1260 = vset.pattern.permute.xlu0 0
    %1261 = vperm.xlu0 %1260, %v1243
    %v1262 = vpop.permute.xlu0 %1261
    %1265 = vset.pattern.permute.xlu0 0
    %1266 = vperm.xlu0 %1265, %v1244
    %v1267 = vpop.permute.xlu0 %1266
    %1270 = vset.pattern.permute.xlu0 0
    %1271 = vperm.xlu0 %1270, %v1245
    %v1272 = vpop.permute.xlu0 %1271
    %1275 = vset.pattern.permute.xlu0 0
    %1276 = vperm.xlu0 %1275, %v1246
    %v1277 = vpop.permute.xlu0 %1276
    %1280 = vset.pattern.permute.xlu0 0
    %1281 = vperm.xlu0 %1280, %v1247
    %v1282 = vpop.permute.xlu0 %1281
    %1285 = vset.pattern.permute.xlu0 0
    %1286 = vperm.xlu0 %1285, %v1248
    %v1287 = vpop.permute.xlu0 %1286
    %1290 = vset.pattern.permute.xlu0 0
    %1291 = vperm.xlu0 %1290, %v1249
    %v1292 = vpop.permute.xlu0 %1291
    %1295 = vset.pattern.permute.xlu0 0
    %1296 = vperm.xlu0 %1295, %v1250
    %v1297 = vpop.permute.xlu0 %1296
    %1300 = vset.pattern.permute.xlu0 0
    %1301 = vperm.xlu0 %1300, %v1251
    %v1302 = vpop.permute.xlu0 %1301
    %1305 = vset.pattern.permute.xlu0 0
    %1306 = vperm.xlu0 %1305, %v1252
    %v1307 = vpop.permute.xlu0 %1306
    %1310 = vset.pattern.permute.xlu0 0
    %1311 = vperm.xlu0 %1310, %v1253
    %v1312 = vpop.permute.xlu0 %1311
    %1315 = vset.pattern.permute.xlu0 0
    %1316 = vperm.xlu0 %1315, %v1254
    %v1317 = vpop.permute.xlu0 %1316
    %1320 = vset.pattern.permute.xlu0 0
    %1321 = vperm.xlu0 %1320, %v1255
    %v1322 = vpop.permute.xlu0 %1321
    %1325 = vset.pattern.permute.xlu0 0
    %1326 = vperm.xlu0 %1325, %v1256
    %v1327 = vpop.permute.xlu0 %1326
    %1330 = vset.pattern.permute.xlu0 0
    %1331 = vperm.xlu0 %1330, %v1257
    %v1332 = vpop.permute.xlu0 %1331
    %1335 = vset.pattern.permute.xlu0 0
    %1336 = vperm.xlu0 %1335, %v1258
    %v1337 = vpop.permute.xlu0 %1336
    %v1339 = vadd.f32 %v1179, %v1262
    %v1340 = vadd.f32 %v1180, %v1262
    %v1341 = vadd.f32 %v1181, %v1262
    %v1342 = vadd.f32 %v1182, %v1262
    %v1343 = vadd.f32 %v1183, %v1267
    %v1344 = vadd.f32 %v1184, %v1267
    %v1345 = vadd.f32 %v1185, %v1267
    %v1346 = vadd.f32 %v1186, %v1267
    %v1347 = vadd.f32 %v1187, %v1272
    %v1348 = vadd.f32 %v1188, %v1272
    %v1349 = vadd.f32 %v1189, %v1272
    %v1350 = vadd.f32 %v1190, %v1272
    %v1351 = vadd.f32 %v1191, %v1277
    %v1352 = vadd.f32 %v1192, %v1277
    %v1353 = vadd.f32 %v1193, %v1277
    %v1354 = vadd.f32 %v1194, %v1277
    %v1355 = vadd.f32 %v1195, %v1282
    %v1356 = vadd.f32 %v1196, %v1282
    %v1357 = vadd.f32 %v1197, %v1282
    %v1358 = vadd.f32 %v1198, %v1282
    %v1359 = vadd.f32 %v1199, %v1287
    %v1360 = vadd.f32 %v1200, %v1287
    %v1361 = vadd.f32 %v1201, %v1287
    %v1362 = vadd.f32 %v1202, %v1287
    %v1363 = vadd.f32 %v1203, %v1292
    %v1364 = vadd.f32 %v1204, %v1292
    %v1365 = vadd.f32 %v1205, %v1292
    %v1366 = vadd.f32 %v1206, %v1292
    %v1367 = vadd.f32 %v1207, %v1297
    %v1368 = vadd.f32 %v1208, %v1297
    %v1369 = vadd.f32 %v1209, %v1297
    %v1370 = vadd.f32 %v1210, %v1297
    %v1371 = vadd.f32 %v1211, %v1302
    %v1372 = vadd.f32 %v1212, %v1302
    %v1373 = vadd.f32 %v1213, %v1302
    %v1374 = vadd.f32 %v1214, %v1302
    %v1375 = vadd.f32 %v1215, %v1307
    %v1376 = vadd.f32 %v1216, %v1307
    %v1377 = vadd.f32 %v1217, %v1307
    %v1378 = vadd.f32 %v1218, %v1307
    %v1379 = vadd.f32 %v1219, %v1312
    %v1380 = vadd.f32 %v1220, %v1312
    %v1381 = vadd.f32 %v1221, %v1312
    %v1382 = vadd.f32 %v1222, %v1312
    %v1383 = vadd.f32 %v1223, %v1317
    %v1384 = vadd.f32 %v1224, %v1317
    %v1385 = vadd.f32 %v1225, %v1317
    %v1386 = vadd.f32 %v1226, %v1317
    %v1387 = vadd.f32 %v1227, %v1322
    %v1388 = vadd.f32 %v1228, %v1322
    %v1389 = vadd.f32 %v1229, %v1322
    %v1390 = vadd.f32 %v1230, %v1322
    %v1391 = vadd.f32 %v1231, %v1327
    %v1392 = vadd.f32 %v1232, %v1327
    %v1393 = vadd.f32 %v1233, %v1327
    %v1394 = vadd.f32 %v1234, %v1327
    %v1395 = vadd.f32 %v1235, %v1332
    %v1396 = vadd.f32 %v1236, %v1332
    %v1397 = vadd.f32 %v1237, %v1332
    %v1398 = vadd.f32 %v1238, %v1332
    %v1399 = vadd.f32 %v1239, %v1337
    %v1400 = vadd.f32 %v1240, %v1337
    %v1401 = vadd.f32 %v1241, %v1337
    %v1402 = vadd.f32 %v1242, %v1337
    %v1403 = vmax.f32 %v1339, 0.0
    %v1404 = vmax.f32 %v1340, 0.0
    %v1405 = vmax.f32 %v1341, 0.0
    %v1406 = vmax.f32 %v1342, 0.0
    %v1407 = vmax.f32 %v1343, 0.0
    %v1408 = vmax.f32 %v1344, 0.0
    %v1409 = vmax.f32 %v1345, 0.0
    %v1410 = vmax.f32 %v1346, 0.0
    %v1411 = vmax.f32 %v1347, 0.0
    %v1412 = vmax.f32 %v1348, 0.0
    %v1413 = vmax.f32 %v1349, 0.0
    %v1414 = vmax.f32 %v1350, 0.0
    %v1415 = vmax.f32 %v1351, 0.0
    %v1416 = vmax.f32 %v1352, 0.0
    %v1417 = vmax.f32 %v1353, 0.0
    %v1418 = vmax.f32 %v1354, 0.0
    %v1419 = vmax.f32 %v1355, 0.0
    %v1420 = vmax.f32 %v1356, 0.0
    %v1421 = vmax.f32 %v1357, 0.0
    %v1422 = vmax.f32 %v1358, 0.0
    %v1423 = vmax.f32 %v1359, 0.0
    %v1424 = vmax.f32 %v1360, 0.0
    %v1425 = vmax.f32 %v1361, 0.0
    %v1426 = vmax.f32 %v1362, 0.0
    %v1427 = vmax.f32 %v1363, 0.0
    %v1428 = vmax.f32 %v1364, 0.0
    %v1429 = vmax.f32 %v1365, 0.0
    %v1430 = vmax.f32 %v1366, 0.0
    %v1431 = vmax.f32 %v1367, 0.0
    %v1432 = vmax.f32 %v1368, 0.0
    %v1433 = vmax.f32 %v1369, 0.0
    %v1434 = vmax.f32 %v1370, 0.0
    %v1435 = vmax.f32 %v1371, 0.0
    %v1436 = vmax.f32 %v1372, 0.0
    %v1437 = vmax.f32 %v1373, 0.0
    %v1438 = vmax.f32 %v1374, 0.0
    %v1439 = vmax.f32 %v1375, 0.0
    %v1440 = vmax.f32 %v1376, 0.0
    %v1441 = vmax.f32 %v1377, 0.0
    %v1442 = vmax.f32 %v1378, 0.0
    %v1443 = vmax.f32 %v1379, 0.0
    %v1444 = vmax.f32 %v1380, 0.0
    %v1445 = vmax.f32 %v1381, 0.0
    %v1446 = vmax.f32 %v1382, 0.0
    %v1447 = vmax.f32 %v1383, 0.0
    %v1448 = vmax.f32 %v1384, 0.0
    %v1449 = vmax.f32 %v1385, 0.0
    %v1450 = vmax.f32 %v1386, 0.0
    %v1451 = vmax.f32 %v1387, 0.0
    %v1452 = vmax.f32 %v1388, 0.0
    %v1453 = vmax.f32 %v1389, 0.0
    %v1454 = vmax.f32 %v1390, 0.0
    %v1455 = vmax.f32 %v1391, 0.0
    %v1456 = vmax.f32 %v1392, 0.0
    %v1457 = vmax.f32 %v1393, 0.0
    %v1458 = vmax.f32 %v1394, 0.0
    %v1459 = vmax.f32 %v1395, 0.0
    %v1460 = vmax.f32 %v1396, 0.0
    %v1461 = vmax.f32 %v1397, 0.0
    %v1462 = vmax.f32 %v1398, 0.0
    %v1463 = vmax.f32 %v1399, 0.0
    %v1464 = vmax.f32 %v1400, 0.0
    %v1465 = vmax.f32 %v1401, 0.0
    %v1466 = vmax.f32 %v1402, 0.0
    %v1467 = vld [vmem:[#allocation5] sm:$0xff]
    %v1468 = vld [vmem:[#allocation5 + $0x8] sm:$0xff]
    %v1469 = vld [vmem:[#allocation5 + $0x10] sm:$0xff]
    %v1470 = vld [vmem:[%s6] sm:$0xff]
    %v1471 = vld [vmem:[%s6 + $0x8] sm:$0xff]
    %v1472 = vld [vmem:[%s6 + $0x10] sm:$0xff]
    %1474 = vset.pattern.permute.xlu0 0
    %1475 = vperm.xlu0 %1474, %v1470
    %v1476 = vpop.permute.xlu0 %1475
    %1479 = vset.pattern.permute.xlu0 0
    %1480 = vperm.xlu0 %1479, %v1471
    %v1481 = vpop.permute.xlu0 %1480
    %1484 = vset.pattern.permute.xlu0 0
    %1485 = vperm.xlu0 %1484, %v1472
    %v1486 = vpop.permute.xlu0 %1485
    %1488 = vmatprep.subr.mxu0 %v1464
    %1489 = vmatpush1.msra.mxu0 %v1463
    %1490 = vmatprep.subr.mxu0 %v1460
    %1491 = vmatpush1.msra.mxu0 %v1459
    %1492 = vmatprep.subr.mxu0 %v1456
    %1493 = vmatpush1.msra.mxu0 %v1455
    %1494 = vmatprep.subr.mxu0 %v1452
    %1495 = vmatpush1.msra.mxu0 %v1451
    %1496 = vmatprep.subr.mxu0 %v1448
    %1497 = vmatpush1.msra.mxu0 %v1447
    %1498 = vmatprep.subr.mxu0 %v1444
    %1499 = vmatpush1.msra.mxu0 %v1443
    %1500 = vmatprep.subr.mxu0 %v1440
    %1501 = vmatpush1.msra.mxu0 %v1439
    %1502 = vmatprep.subr.mxu0 %v1436
    %1503 = vmatpush1.msra.mxu0 %v1435
    %1504 = vmatprep.subr.mxu0 %v1432
    %1505 = vmatpush1.msra.mxu0 %v1431
    %1506 = vmatprep.subr.mxu0 %v1428
    %1507 = vmatpush1.msra.mxu0 %v1427
    %1508 = vmatprep.subr.mxu0 %v1424
    %1509 = vmatpush1.msra.mxu0 %v1423
    %1510 = vmatprep.subr.mxu0 %v1420
    %1511 = vmatpush1.msra.mxu0 %v1419
    %1512 = vmatprep.subr.mxu0 %v1416
    %1513 = vmatpush1.msra.mxu0 %v1415
    %1514 = vmatprep.subr.mxu0 %v1412
    %1515 = vmatpush1.msra.mxu0 %v1411
    %1516 = vmatprep.subr.mxu0 %v1408
    %1517 = vmatpush1.msra.mxu0 %v1407
    %1518 = vmatprep.subr.mxu0 %v1404
    %1519 = vmatpush1.msra.mxu0 %v1403
    %1520 = vmatprep.subr.mxu0 0.0
    %1521 = vmatpush2.msra.mxu0 0.0
    %1522 = vmatprep.subr.mxu0 0.0
    %1523 = vmatpush2.msra.mxu0 0.0
    %1524 = vmatprep.subr.mxu0 0.0
    %1525 = vmatpush2.msra.mxu0 0.0
    %1526 = vmatprep.subr.mxu0 0.0
    %1527 = vmatpush2.msra.mxu0 0.0
    %1528 = vmatprep.subr.mxu0 0.0
    %1529 = vmatpush2.msra.mxu0 0.0
    %1530 = vmatprep.subr.mxu0 0.0
    %1531 = vmatpush2.msra.mxu0 0.0
    %1532 = vmatprep.subr.mxu0 0.0
    %1533 = vmatpush2.msra.mxu0 0.0
    %1534 = vmatprep.subr.mxu0 0.0
    %1535 = vmatpush2.msra.mxu0 0.0
    %1536 = vmatprep.subr.mxu0 0.0
    %1537 = vmatpush2.msra.mxu0 0.0
    %1538 = vmatprep.subr.mxu0 0.0
    %1539 = vmatpush2.msra.mxu0 0.0
    %1540 = vmatprep.subr.mxu0 0.0
    %1541 = vmatpush2.msra.mxu0 0.0
    %1542 = vmatprep.subr.mxu0 0.0
    %1543 = vmatpush2.msra.mxu0 0.0
    %1544 = vmatprep.subr.mxu0 0.0
    %1545 = vmatpush2.msra.mxu0 0.0
    %1546 = vmatprep.subr.mxu0 0.0
    %1547 = vmatpush2.msra.mxu0 0.0
    %1548 = vmatprep.subr.mxu0 0.0
    %1549 = vmatpush2.msra.mxu0 0.0
    %1550 = vmatprep.subr.mxu0 0.0
    %1551 = vmatpush2.msra.mxu0 0.0
    %1552 = vmatprep.mubr.f32.mxu0 0.0
    %1553 = vmatmul.mubr.f32.gmra.mxu0 %v1467
    %v1554 = vpop.f32.mrf.mxu0
    %v1555 = vadd.f32 %v1476, %v1554
    %v1556 = vpop.f32.mrf.mxu0
    %v1557 = vadd.f32 %v1476, %v1556
    %1558 = vmatprep.mubr.f32.mxu0 0.0
    %1559 = vmatmul.mubr.f32.gmra.mxu0 %v1468
    %v1560 = vpop.f32.mrf.mxu0
    %v1561 = vadd.f32 %v1481, %v1560
    %v1562 = vpop.f32.mrf.mxu0
    %v1563 = vadd.f32 %v1481, %v1562
    %1564 = vmatprep.mubr.f32.mxu0 0.0
    %1565 = vmatmul.mubr.f32.gmra.mxu0 %v1469
    %v1566 = vpop.f32.mrf.mxu0
    %v1567 = vadd.f32 %v1486, %v1566
    %v1568 = vpop.f32.mrf.mxu0
    %v1569 = vadd.f32 %v1486, %v1568
    %1570 = vdwg.mxu0
    %1571 = vmatprep.subr.mxu0 %v1466
    %1572 = vmatpush1.msra.mxu0 %v1465
    %1573 = vmatprep.subr.mxu0 %v1462
    %1574 = vmatpush1.msra.mxu0 %v1461
    %1575 = vmatprep.subr.mxu0 %v1458
    %1576 = vmatpush1.msra.mxu0 %v1457
    %1577 = vmatprep.subr.mxu0 %v1454
    %1578 = vmatpush1.msra.mxu0 %v1453
    %1579 = vmatprep.subr.mxu0 %v1450
    %1580 = vmatpush1.msra.mxu0 %v1449
    %1581 = vmatprep.subr.mxu0 %v1446
    %1582 = vmatpush1.msra.mxu0 %v1445
    %1583 = vmatprep.subr.mxu0 %v1442
    %1584 = vmatpush1.msra.mxu0 %v1441
    %1585 = vmatprep.subr.mxu0 %v1438
    %1586 = vmatpush1.msra.mxu0 %v1437
    %1587 = vmatprep.subr.mxu0 %v1434
    %1588 = vmatpush1.msra.mxu0 %v1433
    %1589 = vmatprep.subr.mxu0 %v1430
    %1590 = vmatpush1.msra.mxu0 %v1429
    %1591 = vmatprep.subr.mxu0 %v1426
    %1592 = vmatpush1.msra.mxu0 %v1425
    %1593 = vmatprep.subr.mxu0 %v1422
    %1594 = vmatpush1.msra.mxu0 %v1421
    %1595 = vmatprep.subr.mxu0 %v1418
    %1596 = vmatpush1.msra.mxu0 %v1417
    %1597 = vmatprep.subr.mxu0 %v1414
    %1598 = vmatpush1.msra.mxu0 %v1413
    %1599 = vmatprep.subr.mxu0 %v1410
    %1600 = vmatpush1.msra.mxu0 %v1409
    %1601 = vmatprep.subr.mxu0 %v1406
    %1602 = vmatpush1.msra.mxu0 %v1405
    %1603 = vmatprep.subr.mxu0 0.0
    %1604 = vmatpush2.msra.mxu0 0.0
    %1605 = vmatprep.subr.mxu0 0.0
    %1606 = vmatpush2.msra.mxu0 0.0
    %1607 = vmatprep.subr.mxu0 0.0
    %1608 = vmatpush2.msra.mxu0 0.0
    %1609 = vmatprep.subr.mxu0 0.0
    %1610 = vmatpush2.msra.mxu0 0.0
    %1611 = vmatprep.subr.mxu0 0.0
    %1612 = vmatpush2.msra.mxu0 0.0
    %1613 = vmatprep.subr.mxu0 0.0
    %1614 = vmatpush2.msra.mxu0 0.0
    %1615 = vmatprep.subr.mxu0 0.0
    %1616 = vmatpush2.msra.mxu0 0.0
    %1617 = vmatprep.subr.mxu0 0.0
    %1618 = vmatpush2.msra.mxu0 0.0
    %1619 = vmatprep.subr.mxu0 0.0
    %1620 = vmatpush2.msra.mxu0 0.0
    %1621 = vmatprep.subr.mxu0 0.0
    %1622 = vmatpush2.msra.mxu0 0.0
    %1623 = vmatprep.subr.mxu0 0.0
    %1624 = vmatpush2.msra.mxu0 0.0
    %1625 = vmatprep.subr.mxu0 0.0
    %1626 = vmatpush2.msra.mxu0 0.0
    %1627 = vmatprep.subr.mxu0 0.0
    %1628 = vmatpush2.msra.mxu0 0.0
    %1629 = vmatprep.subr.mxu0 0.0
    %1630 = vmatpush2.msra.mxu0 0.0
    %1631 = vmatprep.subr.mxu0 0.0
    %1632 = vmatpush2.msra.mxu0 0.0
    %1633 = vmatprep.subr.mxu0 0.0
    %1634 = vmatpush2.msra.mxu0 0.0
    %1635 = vmatprep.mubr.f32.mxu0 0.0
    %1636 = vmatmul.mubr.f32.gmra.mxu0 %v1467
    %v1637 = vpop.f32.mrf.mxu0
    %v1638 = vadd.f32 %v1476, %v1637
    %v1639 = vpop.f32.mrf.mxu0
    %v1640 = vadd.f32 %v1476, %v1639
    %1641 = vmatprep.mubr.f32.mxu0 0.0
    %1642 = vmatmul.mubr.f32.gmra.mxu0 %v1468
    %v1643 = vpop.f32.mrf.mxu0
    %v1644 = vadd.f32 %v1481, %v1643
    %v1645 = vpop.f32.mrf.mxu0
    %v1646 = vadd.f32 %v1481, %v1645
    %1647 = vmatprep.mubr.f32.mxu0 0.0
    %1648 = vmatmul.mubr.f32.gmra.mxu0 %v1469
    %v1649 = vpop.f32.mrf.mxu0
    %v1650 = vadd.f32 %v1486, %v1649
    %v1651 = vpop.f32.mrf.mxu0
    %v1652 = vadd.f32 %v1486, %v1651
    %1653 = vdwg.mxu0
    %v1654 = vld [vmem:[%s7] sm:$0xff]
    %v1655 = vld [vmem:[%s7 + $0x8] sm:$0xff]
    %v1656 = vld [vmem:[%s7 + $0x10] sm:$0xff]
    %v1657 = vld [vmem:[%s7 + $0x18] sm:$0xff]
    %v1658 = vld [vmem:[%s7 + $0x20] sm:$0xff]
    %v1659 = vld [vmem:[%s7 + $0x28] sm:$0xff]
    %v1660 = vld [vmem:[%s7 + $0x30] sm:$0xff]
    %v1661 = vld [vmem:[%s7 + $0x38] sm:$0xff]
    %v1662 = vld [vmem:[%s7 + $0x40] sm:$0xff]
    %v1663 = vld [vmem:[%s7 + $0x48] sm:$0xff]
    %v1664 = vld [vmem:[%s7 + $0x50] sm:$0xff]
    %v1665 = vld [vmem:[%s7 + $0x58] sm:$0xff]
    %v1666 = vmul.f32 %v1555, 0.5
    %v1667 = vmul.f32 %v1557, 0.5
    %v1668 = vmul.f32 %v1638, 0.5
    %v1669 = vmul.f32 %v1640, 0.5
    %v1670 = vmul.f32 %v1561, 0.5
    %v1671 = vmul.f32 %v1563, 0.5
    %v1672 = vmul.f32 %v1644, 0.5
    %v1673 = vmul.f32 %v1646, 0.5
    %v1674 = vmul.f32 %v1567, 0.5
    %v1675 = vmul.f32 %v1569, 0.5
    %v1676 = vmul.f32 %v1650, 0.5
    %v1677 = vmul.f32 %v1652, 0.5
    %v1678 = vtanh.pop %v1666
    %v1679 = vtanh.pop %v1667
    %v1680 = vtanh.pop %v1668
    %v1681 = vtanh.pop %v1669
    %v1682 = vtanh.pop %v1670
    %v1683 = vtanh.pop %v1671
    %v1684 = vtanh.pop %v1672
    %v1685 = vtanh.pop %v1673
    %v1686 = vtanh.pop %v1674
    %v1687 = vtanh.pop %v1675
    %v1688 = vtanh.pop %v1676
    %v1689 = vtanh.pop %v1677
    %v1690 = vmul.f32 %v1678, 0.5
    %v1691 = vmul.f32 %v1679, 0.5
    %v1692 = vmul.f32 %v1680, 0.5
    %v1693 = vmul.f32 %v1681, 0.5
    %v1694 = vmul.f32 %v1682, 0.5
    %v1695 = vmul.f32 %v1683, 0.5
    %v1696 = vmul.f32 %v1684, 0.5
    %v1697 = vmul.f32 %v1685, 0.5
    %v1698 = vmul.f32 %v1686, 0.5
    %v1699 = vmul.f32 %v1687, 0.5
    %v1700 = vmul.f32 %v1688, 0.5
    %v1701 = vmul.f32 %v1689, 0.5
    %v1702 = vadd.f32 %v1690, 0.5
    %v1703 = vadd.f32 %v1691, 0.5
    %v1704 = vadd.f32 %v1692, 0.5
    %v1705 = vadd.f32 %v1693, 0.5
    %v1706 = vadd.f32 %v1694, 0.5
    %v1707 = vadd.f32 %v1695, 0.5
    %v1708 = vadd.f32 %v1696, 0.5
    %v1709 = vadd.f32 %v1697, 0.5
    %v1710 = vadd.f32 %v1698, 0.5
    %v1711 = vadd.f32 %v1699, 0.5
    %v1712 = vadd.f32 %v1700, 0.5
    %v1713 = vadd.f32 %v1701, 0.5
    %vm1714 = vcmp.ne.f32.partialorder %v1654, 0.0
    %vm1715 = vcmp.ne.f32.partialorder %v1655, 0.0
    %vm1716 = vcmp.ne.f32.partialorder %v1656, 0.0
    %vm1717 = vcmp.ne.f32.partialorder %v1657, 0.0
    %vm1718 = vcmp.ne.f32.partialorder %v1658, 0.0
    %vm1719 = vcmp.ne.f32.partialorder %v1659, 0.0
    %vm1720 = vcmp.ne.f32.partialorder %v1660, 0.0
    %vm1721 = vcmp.ne.f32.partialorder %v1661, 0.0
    %vm1722 = vcmp.ne.f32.partialorder %v1662, 0.0
    %vm1723 = vcmp.ne.f32.partialorder %v1663, 0.0
    %vm1724 = vcmp.ne.f32.partialorder %v1664, 0.0
    %vm1725 = vcmp.ne.f32.partialorder %v1665, 0.0
    %v1726 = vsel %vm1714, %v1555, 0.0
    %v1727 = vsel %vm1715, %v1557, 0.0
    %v1728 = vsel %vm1716, %v1638, 0.0
    %v1729 = vsel %vm1717, %v1640, 0.0
    %v1730 = vsel %vm1718, %v1561, 0.0
    %v1731 = vsel %vm1719, %v1563, 0.0
    %v1732 = vsel %vm1720, %v1644, 0.0
    %v1733 = vsel %vm1721, %v1646, 0.0
    %v1734 = vsel %vm1722, %v1567, 0.0
    %v1735 = vsel %vm1723, %v1569, 0.0
    %v1736 = vsel %vm1724, %v1650, 0.0
    %v1737 = vsel %vm1725, %v1652, 0.0
    %v1738 = vmul.f32 %v1726, 1.442695
    %v1739 = vpow.pop %v1738
    %v1740 = vmul.f32 %v1727, 1.442695
    %v1741 = vpow.pop %v1740
    %v1742 = vmul.f32 %v1728, 1.442695
    %v1743 = vpow.pop %v1742
    %v1744 = vmul.f32 %v1729, 1.442695
    %v1745 = vpow.pop %v1744
    %v1746 = vmul.f32 %v1730, 1.442695
    %v1747 = vpow.pop %v1746
    %v1748 = vmul.f32 %v1731, 1.442695
    %v1749 = vpow.pop %v1748
    %v1750 = vmul.f32 %v1732, 1.442695
    %v1751 = vpow.pop %v1750
    %v1752 = vmul.f32 %v1733, 1.442695
    %v1753 = vpow.pop %v1752
    %v1754 = vmul.f32 %v1734, 1.442695
    %v1755 = vpow.pop %v1754
    %v1756 = vmul.f32 %v1735, 1.442695
    %v1757 = vpow.pop %v1756
    %v1758 = vmul.f32 %v1736, 1.442695
    %v1759 = vpow.pop %v1758
    %v1760 = vmul.f32 %v1737, 1.442695
    %v1761 = vpow.pop %v1760
    %v1762 = vmul.f32 %v1739, %v1654
    %v1763 = vmul.f32 %v1741, %v1655
    %v1764 = vmul.f32 %v1743, %v1656
    %v1765 = vmul.f32 %v1745, %v1657
    %v1766 = vmul.f32 %v1747, %v1658
    %v1767 = vmul.f32 %v1749, %v1659
    %v1768 = vmul.f32 %v1751, %v1660
    %v1769 = vmul.f32 %v1753, %v1661
    %v1770 = vmul.f32 %v1755, %v1662
    %v1771 = vmul.f32 %v1757, %v1663
    %v1772 = vmul.f32 %v1759, %v1664
    %v1773 = vmul.f32 %v1761, %v1665
    %v1774 = vld [vmem:[%s8] sm:$0xff]
    %v1775 = vld [vmem:[%s8 + $0x8] sm:$0xff]
    %v1776 = vld [vmem:[%s8 + $0x10] sm:$0xff]
    %v1777 = vld [vmem:[%s8 + $0x18] sm:$0xff]
    %v1778 = vld [vmem:[%s8 + $0x20] sm:$0xff]
    %v1779 = vld [vmem:[%s8 + $0x28] sm:$0xff]
    %v1780 = vld [vmem:[%s8 + $0x30] sm:$0xff]
    %v1781 = vld [vmem:[%s8 + $0x38] sm:$0xff]
    %v1782 = vld [vmem:[%s8 + $0x40] sm:$0xff]
    %v1783 = vld [vmem:[%s8 + $0x48] sm:$0xff]
    %v1784 = vld [vmem:[%s8 + $0x50] sm:$0xff]
    %v1785 = vld [vmem:[%s8 + $0x58] sm:$0xff]
    %v1786 = vmul.f32 %v1702, %v1774
    %v1787 = vmul.f32 %v1703, %v1775
    %v1788 = vmul.f32 %v1704, %v1776
    %v1789 = vmul.f32 %v1705, %v1777
    %v1790 = vmul.f32 %v1706, %v1778
    %v1791 = vmul.f32 %v1707, %v1779
    %v1792 = vmul.f32 %v1708, %v1780
    %v1793 = vmul.f32 %v1709, %v1781
    %v1794 = vmul.f32 %v1710, %v1782
    %v1795 = vmul.f32 %v1711, %v1783
    %v1796 = vmul.f32 %v1712, %v1784
    %v1797 = vmul.f32 %v1713, %v1785
    %v1798 = vadd.f32 %v1762, %v1786
    %v1799 = vadd.f32 %v1763, %v1787
    %v1800 = vadd.f32 %v1764, %v1788
    %v1801 = vadd.f32 %v1765, %v1789
    %v1802 = vadd.f32 %v1766, %v1790
    %v1803 = vadd.f32 %v1767, %v1791
    %v1804 = vadd.f32 %v1768, %v1792
    %v1805 = vadd.f32 %v1769, %v1793
    %v1806 = vadd.f32 %v1770, %v1794
    %v1807 = vadd.f32 %v1771, %v1795
    %v1808 = vadd.f32 %v1772, %v1796
    %v1809 = vadd.f32 %v1773, %v1797
    %v1810 = vld [vmem:[%s9] sm:$0xff]
    %v1811 = vld [vmem:[%s9 + $0x8] sm:$0xff]
    %v1812 = vld [vmem:[%s9 + $0x10] sm:$0xff]
    %v1813 = vld [vmem:[%s9 + $0x18] sm:$0xff]
    %v1814 = vld [vmem:[%s9 + $0x20] sm:$0xff]
    %v1815 = vld [vmem:[%s9 + $0x28] sm:$0xff]
    %v1816 = vld [vmem:[%s9 + $0x30] sm:$0xff]
    %v1817 = vld [vmem:[%s9 + $0x38] sm:$0xff]
    %v1818 = vld [vmem:[%s9 + $0x40] sm:$0xff]
    %v1819 = vld [vmem:[%s9 + $0x48] sm:$0xff]
    %v1820 = vld [vmem:[%s9 + $0x50] sm:$0xff]
    %v1821 = vld [vmem:[%s9 + $0x58] sm:$0xff]
    %v1822 = vadd.f32 %v1798, %v1810
    %v1823 = vadd.f32 %v1799, %v1811
    %v1824 = vadd.f32 %v1800, %v1812
    %v1825 = vadd.f32 %v1801, %v1813
    %v1826 = vadd.f32 %v1802, %v1814
    %v1827 = vadd.f32 %v1803, %v1815
    %v1828 = vadd.f32 %v1804, %v1816
    %v1829 = vadd.f32 %v1805, %v1817
    %v1830 = vadd.f32 %v1806, %v1818
    %v1831 = vadd.f32 %v1807, %v1819
    %v1832 = vadd.f32 %v1808, %v1820
    %v1833 = vadd.f32 %v1809, %v1821
    %1834 = vst [vmem:[#allocation7] sm:$0xff] %v1822
    %1835 = vst [vmem:[#allocation7 + $0x8] sm:$0xff] %v1823
    %1836 = vst [vmem:[#allocation7 + $0x10] sm:$0xff] %v1824
    %1837 = vst [vmem:[#allocation7 + $0x18] sm:$0xff] %v1825
    %1838 = vst [vmem:[#allocation7 + $0x20] sm:$0xff] %v1826
    %1839 = vst [vmem:[#allocation7 + $0x28] sm:$0xff] %v1827
    %1840 = vst [vmem:[#allocation7 + $0x30] sm:$0xff] %v1828
    %1841 = vst [vmem:[#allocation7 + $0x38] sm:$0xff] %v1829
    %1842 = vst [vmem:[#allocation7 + $0x40] sm:$0xff] %v1830
    %1843 = vst [vmem:[#allocation7 + $0x48] sm:$0xff] %v1831
    %1844 = vst [vmem:[#allocation7 + $0x50] sm:$0xff] %v1832
    %1845 = vst [vmem:[#allocation7 + $0x58] sm:$0xff] %v1833
    // Predicated region
    $region54: #{tpu_custom_call.1} parent=1 // pred_check
      _
    $region55: #{tpu_custom_call.1} parent=1 // pred_check_branch
      %1847 = sbr.rel (0) target = $region57
    $region56: #{tpu_custom_call.1} parent=1 // pred_region
      %s1849 = ssub.s32 1536, 1536
      %1850 = vsyncadd [#allocation4], %s1849
      %s1851 = sshll.u32 [#allocation7], 4
      %s1852 = int_to_ptr.vmem [resolvable:$true] %s1851
      %1857 = dma.vmem_to_hbm [thread:$0]  %s1852, 1536, %s11, [#allocation4], 512, 512, 32
    $region57: #{tpu_custom_call.1} parent=1 // pred_fallthru
      _
    // Predicated region
    $region58: #{tpu_custom_call.1} parent=1 // pred_check
      _
    $region59: #{tpu_custom_call.1} parent=1 // pred_check_branch
      %1859 = sbr.rel (0) target = $region61
    $region60: #{tpu_custom_call.1} parent=1 // pred_region
      %1860 = dma.done [#allocation4], 1536
    $region61: #{tpu_custom_call.1} parent=1 // pred_fallthru
      _
    %1861 = vsyncpa [#allocation3], 1
    %1862 = vsyncpa [#allocation6], 1
    %1863 = vsyncpa [#allocation4], 1

</llo_original>
